<compile_context>
chip_gen: v7x
topology: tpu7x:2x2x1
jax: 0.10.0
libtpu: 0.0.40
codegen_flags: <defaults>
</compile_context>

<pallas_src>
import functools

import jax
import jax.numpy as jnp
from jax.experimental import pallas as pl
from jax.experimental.pallas import tpu as pltpu


def _basic_block_kernel(p1_ref, w1_ref, a1_ref, uw_ref, ua_ref, mask_ref, o_ref,
                        act_pad, mid_pad, pat,
                        *, nlayers, cout, ho, wo, compute_dtype):
    """Fused BasicBlock for one batch element.

    In-kernel activation layout: a zero-padded (Ho+2, Wo+2) grid stored row-major and
    flattened onto the lane axis per channel:  act_pad[c, r*(Wo+2) + col].
    A 3x3 stride-1 tap (kh, kw) is then the lane-contiguous slice
        act_pad[:, kh*(Wo+2)+kw : kh*(Wo+2)+kw + Ho*(Wo+2)]
    ("wrap tolerant": the 2 columns per row that wrap across a row boundary produce garbage
    which is masked before write-back / cropped by the wrapper).
    """
    wp = wo + 2
    L = ho * wp                       # flat length of the Ho x (Wo+2) output window
    interior = pl.ds(wp + 1, L)       # offset of padded-grid position (1, 1)

    # Zero both padded scratches once per batch element: the 1-pixel border must stay zero.
    act_pad[...] = jnp.zeros_like(act_pad)
    mid_pad[...] = jnp.zeros_like(mid_pad)

    valid = mask_ref[...]             # (1, L): 1.0 on real columns, 0.0 on the 2 wrap columns

    def conv_prelu(patches, w2d, alpha):
        # ONE MXU matmul per conv: (Cout, 9*Cin) @ (9*Cin, L) -> (Cout, L), spatial on lanes.
        y = jnp.dot(w2d.astype(compute_dtype), patches.astype(compute_dtype),
                    preferred_element_type=jnp.float32)
        return jnp.where(y > 0, y, y * alpha)   # per-channel PReLU, alpha is (Cout, 1)

    def im2col(src_pad):
        # Build the (9*Cout, L) patch matrix with 9 sublane-block copies of lane-contiguous
        # slices -- no reshapes, no strided access.
        for t in range(9):
            kh, kw = t // 3, t % 3
            pat[pl.ds(t * cout, cout), :] = src_pad[:, pl.ds(kh * wp + kw, L)]

    # ---- stem: conv3x3 stride-2 + PReLU (its im2col is supplied by the wrapper, once) ----
    y = conv_prelu(p1_ref[0], w1_ref[...], a1_ref[...])   # wrap columns are exactly 0 here

    if nlayers == 0:
        o_ref[0] = y.astype(o_ref.dtype)
        return
    act_pad[:, interior] = y

    # ---- BasicUnits: PReLU(conv(PReLU(conv(x)))) + x, fully VMEM-resident ----
    for i in range(nlayers):
        im2col(act_pad)
        y1 = conv_prelu(pat[...], uw_ref[i, 0], ua_ref[i, 0])
        mid_pad[:, interior] = y1 * valid                  # zero wrap cols -> valid padded grid

        im2col(mid_pad)
        y2 = conv_prelu(pat[...], uw_ref[i, 1], ua_ref[i, 1])
        y2 = y2 + act_pad[:, interior]                     # residual (wrap cols of res are 0)

        if i == nlayers - 1:
            o_ref[0] = y2.astype(o_ref.dtype)              # wrap cols cropped by the wrapper
        else:
            act_pad[:, interior] = y2 * valid


def basic_block_forward(params, x_nchw, *, compute_dtype=jnp.float32):
    """Pallas forward of the whole BasicBlock. Input/output NCHW like the PyTorch module."""
    N, Cin, H, W = x_nchw.shape
    w1 = params["conv1_w"]                                 # (3, 3, Cin, Cout) HWIO
    Cout = w1.shape[-1]
    stride = 2
    Ho = (H + 2 - 3) // stride + 1
    Wo = (W + 2 - 3) // stride + 1
    Wp = Wo + 2
    L = Ho * Wp
    nlayers = len(params["units"])

    # One-time host im2col of the raw input for the stride-2 stem conv (NOT per-conv glue).
    # Columns are laid out as the flat Ho x (Wo+2) window with 2 zero wrap columns per row,
    # so the stem's output drops straight into the in-kernel padded-grid layout.
    xpad = jnp.pad(x_nchw, ((0, 0), (0, 0), (1, 1), (1, 1)))
    taps = [xpad[:, :, kh:kh + stride * Ho:stride, kw:kw + stride * Wo:stride]
            for kh in range(3) for kw in range(3)]         # each (N, Cin, Ho, Wo)
    p1 = jnp.stack(taps, axis=1)                           # (N, 9, Cin, Ho, Wo)
    p1 = jnp.pad(p1, ((0, 0), (0, 0), (0, 0), (0, 0), (0, 2)))
    p1 = p1.reshape(N, 9 * Cin, L)                         # (N, 9*Cin, Ho*(Wo+2))

    # Weights flattened to 2-D (Cout, 9*Cin) matching the patch row order (kh, kw, cin).
    w1_2d = jnp.transpose(w1, (3, 0, 1, 2)).reshape(Cout, 9 * Cin)
    a1 = params["relu1_a"].reshape(Cout, 1)

    if nlayers > 0:
        uw = jnp.stack([jnp.stack([
            jnp.transpose(u["w1"], (3, 0, 1, 2)).reshape(Cout, 9 * Cout),
            jnp.transpose(u["w2"], (3, 0, 1, 2)).reshape(Cout, 9 * Cout)])
            for u in params["units"]])                     # (nlayers, 2, Cout, 9*Cout)
        ua = jnp.stack([jnp.stack([u["a1"].reshape(Cout, 1), u["a2"].reshape(Cout, 1)])
                        for u in params["units"]])         # (nlayers, 2, Cout, 1)
    else:
        uw = jnp.zeros((1, 2, Cout, 9 * Cout), jnp.float32)
        ua = jnp.zeros((1, 2, Cout, 1), jnp.float32)
    nl = max(nlayers, 1)

    mask = (jnp.arange(L) % Wp < Wo).astype(jnp.float32).reshape(1, L)

    kernel = functools.partial(_basic_block_kernel, nlayers=nlayers, cout=Cout,
                               ho=Ho, wo=Wo, compute_dtype=compute_dtype)

    out_flat = pl.pallas_call(
        kernel,
        out_shape=jax.ShapeDtypeStruct((N, Cout, L), jnp.float32),
        grid=(N,),
        in_specs=[
            pl.BlockSpec((1, 9 * Cin, L), lambda n: (n, 0, 0)),          # stem patches
            pl.BlockSpec((Cout, 9 * Cin), lambda n: (0, 0)),             # stem weight (resident)
            pl.BlockSpec((Cout, 1), lambda n: (0, 0)),                   # stem PReLU alpha
            pl.BlockSpec((nl, 2, Cout, 9 * Cout), lambda n: (0, 0, 0, 0)),  # unit weights
            pl.BlockSpec((nl, 2, Cout, 1), lambda n: (0, 0, 0, 0)),      # unit alphas
            pl.BlockSpec((1, L), lambda n: (0, 0)),                      # wrap-column mask
        ],
        out_specs=pl.BlockSpec((1, Cout, L), lambda n: (n, 0, 0)),
        scratch_shapes=[
            pltpu.VMEM((Cout, (Ho + 3) * Wp), jnp.float32),   # padded activation grid
            pltpu.VMEM((Cout, (Ho + 3) * Wp), jnp.float32),   # padded mid-unit grid
            pltpu.VMEM((9 * Cout, L), jnp.float32),           # im2col patch matrix
        ],
        compiler_params=pltpu.CompilerParams(
            dimension_semantics=("parallel",),                # batch across v7x TensorCores
            vmem_limit_bytes=32 * 1024 * 1024,
        ),
    )(p1, w1_2d, a1, uw, ua, mask)

    # Crop the 2 wrap columns per row; result is already NCHW.
    return out_flat.reshape(N, Cout, Ho, Wp)[:, :, :, :Wo]


def init_basic_block_params(key, inplanes, outplanes, nlayers):
    """Deterministic synthetic init mirroring the PyTorch __init__:
    conv1: xavier_normal_, PReLU alphas: 0.25, BasicUnit convs: normal(std=0.01). HWIO weights."""
    keys = jax.random.split(key, 1 + 2 * nlayers)
    fan_in, fan_out = inplanes * 9, outplanes * 9
    xavier_std = (2.0 / (fan_in + fan_out)) ** 0.5
    params = {
        "conv1_w": xavier_std
        * jax.random.normal(keys[0], (3, 3, inplanes, outplanes), jnp.float32),
        "relu1_a": jnp.full((outplanes,), 0.25, jnp.float32),
        "units": [],
    }
    for i in range(nlayers):
        params["units"].append(
            {
                "w1": 0.01 * jax.random.normal(keys[1 + 2 * i], (3, 3, outplanes, outplanes), jnp.float32),
                "a1": jnp.full((outplanes,), 0.25, jnp.float32),
                "w2": 0.01 * jax.random.normal(keys[2 + 2 * i], (3, 3, outplanes, outplanes), jnp.float32),
                "a2": jnp.full((outplanes,), 0.25, jnp.float32),
            }
        )
    return params


# ---- pure-JAX reference for the correctness check ----
def _ref_conv_prelu(x, w, a, stride, residual=None):
    y = jax.lax.conv_general_dilated(
        x, w, window_strides=(stride, stride), padding=((1, 1), (1, 1)),
        dimension_numbers=("NHWC", "HWIO", "NHWC"),
        precision=jax.lax.Precision.HIGHEST,
    )
    y = jnp.where(y > 0, y, y * a[None, None, None, :])
    if residual is not None:
        y = y + residual
    return y


def ref_forward(params, x_nchw):
    x = jnp.transpose(x_nchw, (0, 2, 3, 1))
    x = _ref_conv_prelu(x, params["conv1_w"], params["relu1_a"], 2)
    for u in params["units"]:
        y = _ref_conv_prelu(x, u["w1"], u["a1"], 1)
        x = _ref_conv_prelu(y, u["w2"], u["a2"], 1, residual=x)
    return jnp.transpose(x, (0, 3, 1, 2))


if __name__ == "__main__":
    key = jax.random.PRNGKey(0)
    k_param, k_x = jax.random.split(key)

    N, inplanes, outplanes, H, W, nlayers = 2, 4, 8, 16, 16, 2
    params = init_basic_block_params(k_param, inplanes, outplanes, nlayers)
    x = jax.random.normal(k_x, (N, inplanes, H, W), jnp.float32)  # NCHW like PyTorch

    fwd = jax.jit(basic_block_forward)
    out = jax.block_until_ready(fwd(params, x))
    assert out.shape == (N, outplanes, H // 2, W // 2), out.shape

    ref = jax.block_until_ready(ref_forward(params, x))
    err = float(jnp.max(jnp.abs(out - ref)))
    assert jnp.allclose(out, ref, atol=1e-2, rtol=1e-2), err

    print("KERNEL_OK")
</pallas_src>

<mosaic_0001>
module attributes {stable_mosaic.version = 11 : i64} {
  func.func @_basic_block_kernel(%arg0: i32, %arg1: memref<1x36x80xf32, #tpu.memory_space<vmem>>, %arg2: memref<8x36xf32, #tpu.memory_space<vmem>>, %arg3: memref<8x1xf32, #tpu.memory_space<vmem>>, %arg4: memref<2x2x8x72xf32, #tpu.memory_space<vmem>>, %arg5: memref<2x2x8x1xf32, #tpu.memory_space<vmem>>, %arg6: memref<1x80xf32, #tpu.memory_space<vmem>>, %arg7: memref<1x8x80xf32, #tpu.memory_space<vmem>>, %arg8: memref<8x110xf32, #tpu.memory_space<vmem>>, %arg9: memref<8x110xf32, #tpu.memory_space<vmem>>, %arg10: memref<72x80xf32, #tpu.memory_space<vmem>>) attributes {dimension_semantics = [#tpu.dimension_semantics<parallel>], iteration_bounds = array<i64: 2>, scalar_prefetch = 0 : i64, scratch_operands = 3 : i64, tpu.core_type = #tpu.core_type<tc>, window_params = [{transform_indices = @transform_0, window_bounds = array<i64: 1, 36, 80>}, {pipeline_mode = #tpu.pipeline_mode<synchronous>, transform_indices = @transform_1, window_bounds = array<i64: 8, 36>}, {pipeline_mode = #tpu.pipeline_mode<synchronous>, transform_indices = @transform_2, window_bounds = array<i64: 8, 1>}, {pipeline_mode = #tpu.pipeline_mode<synchronous>, transform_indices = @transform_3, window_bounds = array<i64: 2, 2, 8, 72>}, {pipeline_mode = #tpu.pipeline_mode<synchronous>, transform_indices = @transform_4, window_bounds = array<i64: 2, 2, 8, 1>}, {pipeline_mode = #tpu.pipeline_mode<synchronous>, transform_indices = @transform_5, window_bounds = array<i64: 1, 80>}, {transform_indices = @transform_6, window_bounds = array<i64: 1, 8, 80>}]} {
    %cst = arith.constant 0.000000e+00 : f32
    %0 = vector.broadcast %cst : f32 to vector<8x110xf32>
    %c0 = arith.constant 0 : index
    %c0_0 = arith.constant 0 : index
    %1 = vector.load %arg8[%c0, %c0_0] : memref<8x110xf32, #tpu.memory_space<vmem>>, vector<8x110xf32>
    tpu.vector_store %arg8[%c0, %c0_0], %0 {strides = array<i32>} : memref<8x110xf32, #tpu.memory_space<vmem>>, vector<8x110xf32>,
    %cst_1 = arith.constant 0.000000e+00 : f32
    %2 = vector.broadcast %cst_1 : f32 to vector<8x110xf32>
    %c0_2 = arith.constant 0 : index
    %c0_3 = arith.constant 0 : index
    %3 = vector.load %arg9[%c0_2, %c0_3] : memref<8x110xf32, #tpu.memory_space<vmem>>, vector<8x110xf32>
    tpu.vector_store %arg9[%c0_2, %c0_3], %2 {strides = array<i32>} : memref<8x110xf32, #tpu.memory_space<vmem>>, vector<8x110xf32>,
    %c0_4 = arith.constant 0 : index
    %c0_5 = arith.constant 0 : index
    %4 = vector.load %arg6[%c0_4, %c0_5] : memref<1x80xf32, #tpu.memory_space<vmem>>, vector<1x80xf32>
    %c0_6 = arith.constant 0 : index
    %c0_7 = arith.constant 0 : index
    %c0_8 = arith.constant 0 : index
    %5 = vector.load %arg1[%c0_6, %c0_7, %c0_8] : memref<1x36x80xf32, #tpu.memory_space<vmem>>, vector<1x36x80xf32>
    %6 = vector.shape_cast %5 : vector<1x36x80xf32> to vector<36x80xf32>
    %c0_9 = arith.constant 0 : index
    %c0_10 = arith.constant 0 : index
    %7 = vector.load %arg2[%c0_9, %c0_10] : memref<8x36xf32, #tpu.memory_space<vmem>>, vector<8x36xf32>
    %c0_11 = arith.constant 0 : index
    %c0_12 = arith.constant 0 : index
    %8 = vector.load %arg3[%c0_11, %c0_12] : memref<8x1xf32, #tpu.memory_space<vmem>>, vector<8x1xf32>
    %cst_13 = arith.constant dense<0.000000e+00> : vector<8x80xf32>
    %9 = tpu.matmul %7, %6, %cst_13 {dimension_numbers = #tpu.dot_dimension_numbers<[1], [0], [0], [1], [0, 0, 1, 1], [], []>} : vector<8x36xf32>, vector<36x80xf32>, vector<8x80xf32> -> vector<8x80xf32>
    %cst_14 = arith.constant 0.000000e+00 : f32
    %10 = vector.broadcast %cst_14 : f32 to vector<8x80xf32>
    %11 = arith.cmpf ogt, %9, %10 : vector<8x80xf32>
    %12 = vector.broadcast %8 : vector<8x1xf32> to vector<8x80xf32>
    %13 = arith.mulf %9, %12 : vector<8x80xf32>
    %14 = arith.select %11, %9, %13 : vector<8x80xi1>, vector<8x80xf32>
    %c0_15 = arith.constant 0 : index
    %c11 = arith.constant 11 : index
    %15 = vector.load %arg8[%c0_15, %c11] : memref<8x110xf32, #tpu.memory_space<vmem>>, vector<8x80xf32>
    tpu.vector_store %arg8[%c0_15, %c11], %14 {strides = array<i32>} : memref<8x110xf32, #tpu.memory_space<vmem>>, vector<8x80xf32>,
    %c0_16 = arith.constant 0 : index
    %c0_17 = arith.constant 0 : index
    %16 = vector.load %arg8[%c0_16, %c0_17] : memref<8x110xf32, #tpu.memory_space<vmem>>, vector<8x80xf32>
    %c0_18 = arith.constant 0 : index
    %c0_19 = arith.constant 0 : index
    %17 = vector.load %arg10[%c0_18, %c0_19] : memref<72x80xf32, #tpu.memory_space<vmem>>, vector<8x80xf32>
    tpu.vector_store %arg10[%c0_18, %c0_19], %16 {strides = array<i32>} : memref<72x80xf32, #tpu.memory_space<vmem>>, vector<8x80xf32>,
    %c0_20 = arith.constant 0 : index
    %c1 = arith.constant 1 : index
    %18 = vector.load %arg8[%c0_20, %c1] : memref<8x110xf32, #tpu.memory_space<vmem>>, vector<8x80xf32>
    %c8 = arith.constant 8 : index
    %c0_21 = arith.constant 0 : index
    %19 = vector.load %arg10[%c8, %c0_21] : memref<72x80xf32, #tpu.memory_space<vmem>>, vector<8x80xf32>
    tpu.vector_store %arg10[%c8, %c0_21], %18 {strides = array<i32>} : memref<72x80xf32, #tpu.memory_space<vmem>>, vector<8x80xf32>,
    %c0_22 = arith.constant 0 : index
    %c2 = arith.constant 2 : index
    %20 = vector.load %arg8[%c0_22, %c2] : memref<8x110xf32, #tpu.memory_space<vmem>>, vector<8x80xf32>
    %c16 = arith.constant 16 : index
    %c0_23 = arith.constant 0 : index
    %21 = vector.load %arg10[%c16, %c0_23] : memref<72x80xf32, #tpu.memory_space<vmem>>, vector<8x80xf32>
    tpu.vector_store %arg10[%c16, %c0_23], %20 {strides = array<i32>} : memref<72x80xf32, #tpu.memory_space<vmem>>, vector<8x80xf32>,
    %c0_24 = arith.constant 0 : index
    %c10 = arith.constant 10 : index
    %22 = vector.load %arg8[%c0_24, %c10] : memref<8x110xf32, #tpu.memory_space<vmem>>, vector<8x80xf32>
    %c24 = arith.constant 24 : index
    %c0_25 = arith.constant 0 : index
    %23 = vector.load %arg10[%c24, %c0_25] : memref<72x80xf32, #tpu.memory_space<vmem>>, vector<8x80xf32>
    tpu.vector_store %arg10[%c24, %c0_25], %22 {strides = array<i32>} : memref<72x80xf32, #tpu.memory_space<vmem>>, vector<8x80xf32>,
    %c0_26 = arith.constant 0 : index
    %c11_27 = arith.constant 11 : index
    %24 = vector.load %arg8[%c0_26, %c11_27] : memref<8x110xf32, #tpu.memory_space<vmem>>, vector<8x80xf32>
    %c32 = arith.constant 32 : index
    %c0_28 = arith.constant 0 : index
    %25 = vector.load %arg10[%c32, %c0_28] : memref<72x80xf32, #tpu.memory_space<vmem>>, vector<8x80xf32>
    tpu.vector_store %arg10[%c32, %c0_28], %24 {strides = array<i32>} : memref<72x80xf32, #tpu.memory_space<vmem>>, vector<8x80xf32>,
    %c0_29 = arith.constant 0 : index
    %c12 = arith.constant 12 : index
    %26 = vector.load %arg8[%c0_29, %c12] : memref<8x110xf32, #tpu.memory_space<vmem>>, vector<8x80xf32>
    %c40 = arith.constant 40 : index
    %c0_30 = arith.constant 0 : index
    %27 = vector.load %arg10[%c40, %c0_30] : memref<72x80xf32, #tpu.memory_space<vmem>>, vector<8x80xf32>
    tpu.vector_store %arg10[%c40, %c0_30], %26 {strides = array<i32>} : memref<72x80xf32, #tpu.memory_space<vmem>>, vector<8x80xf32>,
    %c0_31 = arith.constant 0 : index
    %c20 = arith.constant 20 : index
    %28 = vector.load %arg8[%c0_31, %c20] : memref<8x110xf32, #tpu.memory_space<vmem>>, vector<8x80xf32>
    %c48 = arith.constant 48 : index
    %c0_32 = arith.constant 0 : index
    %29 = vector.load %arg10[%c48, %c0_32] : memref<72x80xf32, #tpu.memory_space<vmem>>, vector<8x80xf32>
    tpu.vector_store %arg10[%c48, %c0_32], %28 {strides = array<i32>} : memref<72x80xf32, #tpu.memory_space<vmem>>, vector<8x80xf32>,
    %c0_33 = arith.constant 0 : index
    %c21 = arith.constant 21 : index
    %30 = vector.load %arg8[%c0_33, %c21] : memref<8x110xf32, #tpu.memory_space<vmem>>, vector<8x80xf32>
    %c56 = arith.constant 56 : index
    %c0_34 = arith.constant 0 : index
    %31 = vector.load %arg10[%c56, %c0_34] : memref<72x80xf32, #tpu.memory_space<vmem>>, vector<8x80xf32>
    tpu.vector_store %arg10[%c56, %c0_34], %30 {strides = array<i32>} : memref<72x80xf32, #tpu.memory_space<vmem>>, vector<8x80xf32>,
    %c0_35 = arith.constant 0 : index
    %c22 = arith.constant 22 : index
    %32 = vector.load %arg8[%c0_35, %c22] : memref<8x110xf32, #tpu.memory_space<vmem>>, vector<8x80xf32>
    %c64 = arith.constant 64 : index
    %c0_36 = arith.constant 0 : index
    %33 = vector.load %arg10[%c64, %c0_36] : memref<72x80xf32, #tpu.memory_space<vmem>>, vector<8x80xf32>
    tpu.vector_store %arg10[%c64, %c0_36], %32 {strides = array<i32>} : memref<72x80xf32, #tpu.memory_space<vmem>>, vector<8x80xf32>,
    %c0_37 = arith.constant 0 : index
    %c0_38 = arith.constant 0 : index
    %34 = vector.load %arg10[%c0_37, %c0_38] : memref<72x80xf32, #tpu.memory_space<vmem>>, vector<72x80xf32>
    %c0_39 = arith.constant 0 : index
    %c0_40 = arith.constant 0 : index
    %c0_41 = arith.constant 0 : index
    %c0_42 = arith.constant 0 : index
    %35 = vector.load %arg4[%c0_39, %c0_40, %c0_41, %c0_42] : memref<2x2x8x72xf32, #tpu.memory_space<vmem>>, vector<1x1x8x72xf32>
    %36 = vector.shape_cast %35 : vector<1x1x8x72xf32> to vector<8x72xf32>
    %c0_43 = arith.constant 0 : index
    %c0_44 = arith.constant 0 : index
    %c0_45 = arith.constant 0 : index
    %c0_46 = arith.constant 0 : index
    %37 = vector.load %arg5[%c0_43, %c0_44, %c0_45, %c0_46] : memref<2x2x8x1xf32, #tpu.memory_space<vmem>>, vector<1x1x8x1xf32>
    %38 = vector.shape_cast %37 : vector<1x1x8x1xf32> to vector<8x1xf32>
    %cst_47 = arith.constant dense<0.000000e+00> : vector<8x80xf32>
    %39 = tpu.matmul %36, %34, %cst_47 {dimension_numbers = #tpu.dot_dimension_numbers<[1], [0], [0], [1], [0, 0, 1, 1], [], []>} : vector<8x72xf32>, vector<72x80xf32>, vector<8x80xf32> -> vector<8x80xf32>
    %cst_48 = arith.constant 0.000000e+00 : f32
    %40 = vector.broadcast %cst_48 : f32 to vector<8x80xf32>
    %41 = arith.cmpf ogt, %39, %40 : vector<8x80xf32>
    %42 = vector.broadcast %38 : vector<8x1xf32> to vector<8x80xf32>
    %43 = arith.mulf %39, %42 : vector<8x80xf32>
    %44 = arith.select %41, %39, %43 : vector<8x80xi1>, vector<8x80xf32>
    %45 = vector.broadcast %4 : vector<1x80xf32> to vector<8x80xf32>
    %46 = arith.mulf %44, %45 : vector<8x80xf32>
    %c0_49 = arith.constant 0 : index
    %c11_50 = arith.constant 11 : index
    %47 = vector.load %arg9[%c0_49, %c11_50] : memref<8x110xf32, #tpu.memory_space<vmem>>, vector<8x80xf32>
    tpu.vector_store %arg9[%c0_49, %c11_50], %46 {strides = array<i32>} : memref<8x110xf32, #tpu.memory_space<vmem>>, vector<8x80xf32>,
    %c0_51 = arith.constant 0 : index
    %c0_52 = arith.constant 0 : index
    %48 = vector.load %arg9[%c0_51, %c0_52] : memref<8x110xf32, #tpu.memory_space<vmem>>, vector<8x80xf32>
    %c0_53 = arith.constant 0 : index
    %c0_54 = arith.constant 0 : index
    %49 = vector.load %arg10[%c0_53, %c0_54] : memref<72x80xf32, #tpu.memory_space<vmem>>, vector<8x80xf32>
    tpu.vector_store %arg10[%c0_53, %c0_54], %48 {strides = array<i32>} : memref<72x80xf32, #tpu.memory_space<vmem>>, vector<8x80xf32>,
    %c0_55 = arith.constant 0 : index
    %c1_56 = arith.constant 1 : index
    %50 = vector.load %arg9[%c0_55, %c1_56] : memref<8x110xf32, #tpu.memory_space<vmem>>, vector<8x80xf32>
    %c8_57 = arith.constant 8 : index
    %c0_58 = arith.constant 0 : index
    %51 = vector.load %arg10[%c8_57, %c0_58] : memref<72x80xf32, #tpu.memory_space<vmem>>, vector<8x80xf32>
    tpu.vector_store %arg10[%c8_57, %c0_58], %50 {strides = array<i32>} : memref<72x80xf32, #tpu.memory_space<vmem>>, vector<8x80xf32>,
    %c0_59 = arith.constant 0 : index
    %c2_60 = arith.constant 2 : index
    %52 = vector.load %arg9[%c0_59, %c2_60] : memref<8x110xf32, #tpu.memory_space<vmem>>, vector<8x80xf32>
    %c16_61 = arith.constant 16 : index
    %c0_62 = arith.constant 0 : index
    %53 = vector.load %arg10[%c16_61, %c0_62] : memref<72x80xf32, #tpu.memory_space<vmem>>, vector<8x80xf32>
    tpu.vector_store %arg10[%c16_61, %c0_62], %52 {strides = array<i32>} : memref<72x80xf32, #tpu.memory_space<vmem>>, vector<8x80xf32>,
    %c0_63 = arith.constant 0 : index
    %c10_64 = arith.constant 10 : index
    %54 = vector.load %arg9[%c0_63, %c10_64] : memref<8x110xf32, #tpu.memory_space<vmem>>, vector<8x80xf32>
    %c24_65 = arith.constant 24 : index
    %c0_66 = arith.constant 0 : index
    %55 = vector.load %arg10[%c24_65, %c0_66] : memref<72x80xf32, #tpu.memory_space<vmem>>, vector<8x80xf32>
    tpu.vector_store %arg10[%c24_65, %c0_66], %54 {strides = array<i32>} : memref<72x80xf32, #tpu.memory_space<vmem>>, vector<8x80xf32>,
    %c0_67 = arith.constant 0 : index
    %c11_68 = arith.constant 11 : index
    %56 = vector.load %arg9[%c0_67, %c11_68] : memref<8x110xf32, #tpu.memory_space<vmem>>, vector<8x80xf32>
    %c32_69 = arith.constant 32 : index
    %c0_70 = arith.constant 0 : index
    %57 = vector.load %arg10[%c32_69, %c0_70] : memref<72x80xf32, #tpu.memory_space<vmem>>, vector<8x80xf32>
    tpu.vector_store %arg10[%c32_69, %c0_70], %56 {strides = array<i32>} : memref<72x80xf32, #tpu.memory_space<vmem>>, vector<8x80xf32>,
    %c0_71 = arith.constant 0 : index
    %c12_72 = arith.constant 12 : index
    %58 = vector.load %arg9[%c0_71, %c12_72] : memref<8x110xf32, #tpu.memory_space<vmem>>, vector<8x80xf32>
    %c40_73 = arith.constant 40 : index
    %c0_74 = arith.constant 0 : index
    %59 = vector.load %arg10[%c40_73, %c0_74] : memref<72x80xf32, #tpu.memory_space<vmem>>, vector<8x80xf32>
    tpu.vector_store %arg10[%c40_73, %c0_74], %58 {strides = array<i32>} : memref<72x80xf32, #tpu.memory_space<vmem>>, vector<8x80xf32>,
    %c0_75 = arith.constant 0 : index
    %c20_76 = arith.constant 20 : index
    %60 = vector.load %arg9[%c0_75, %c20_76] : memref<8x110xf32, #tpu.memory_space<vmem>>, vector<8x80xf32>
    %c48_77 = arith.constant 48 : index
    %c0_78 = arith.constant 0 : index
    %61 = vector.load %arg10[%c48_77, %c0_78] : memref<72x80xf32, #tpu.memory_space<vmem>>, vector<8x80xf32>
    tpu.vector_store %arg10[%c48_77, %c0_78], %60 {strides = array<i32>} : memref<72x80xf32, #tpu.memory_space<vmem>>, vector<8x80xf32>,
    %c0_79 = arith.constant 0 : index
    %c21_80 = arith.constant 21 : index
    %62 = vector.load %arg9[%c0_79, %c21_80] : memref<8x110xf32, #tpu.memory_space<vmem>>, vector<8x80xf32>
    %c56_81 = arith.constant 56 : index
    %c0_82 = arith.constant 0 : index
    %63 = vector.load %arg10[%c56_81, %c0_82] : memref<72x80xf32, #tpu.memory_space<vmem>>, vector<8x80xf32>
    tpu.vector_store %arg10[%c56_81, %c0_82], %62 {strides = array<i32>} : memref<72x80xf32, #tpu.memory_space<vmem>>, vector<8x80xf32>,
    %c0_83 = arith.constant 0 : index
    %c22_84 = arith.constant 22 : index
    %64 = vector.load %arg9[%c0_83, %c22_84] : memref<8x110xf32, #tpu.memory_space<vmem>>, vector<8x80xf32>
    %c64_85 = arith.constant 64 : index
    %c0_86 = arith.constant 0 : index
    %65 = vector.load %arg10[%c64_85, %c0_86] : memref<72x80xf32, #tpu.memory_space<vmem>>, vector<8x80xf32>
    tpu.vector_store %arg10[%c64_85, %c0_86], %64 {strides = array<i32>} : memref<72x80xf32, #tpu.memory_space<vmem>>, vector<8x80xf32>,
    %c0_87 = arith.constant 0 : index
    %c0_88 = arith.constant 0 : index
    %66 = vector.load %arg10[%c0_87, %c0_88] : memref<72x80xf32, #tpu.memory_space<vmem>>, vector<72x80xf32>
    %c0_89 = arith.constant 0 : index
    %c1_90 = arith.constant 1 : index
    %c0_91 = arith.constant 0 : index
    %c0_92 = arith.constant 0 : index
    %67 = vector.load %arg4[%c0_89, %c1_90, %c0_91, %c0_92] : memref<2x2x8x72xf32, #tpu.memory_space<vmem>>, vector<1x1x8x72xf32>
    %68 = vector.shape_cast %67 : vector<1x1x8x72xf32> to vector<8x72xf32>
    %c0_93 = arith.constant 0 : index
    %c1_94 = arith.constant 1 : index
    %c0_95 = arith.constant 0 : index
    %c0_96 = arith.constant 0 : index
    %69 = vector.load %arg5[%c0_93, %c1_94, %c0_95, %c0_96] : memref<2x2x8x1xf32, #tpu.memory_space<vmem>>, vector<1x1x8x1xf32>
    %70 = vector.shape_cast %69 : vector<1x1x8x1xf32> to vector<8x1xf32>
    %cst_97 = arith.constant dense<0.000000e+00> : vector<8x80xf32>
    %71 = tpu.matmul %68, %66, %cst_97 {dimension_numbers = #tpu.dot_dimension_numbers<[1], [0], [0], [1], [0, 0, 1, 1], [], []>} : vector<8x72xf32>, vector<72x80xf32>, vector<8x80xf32> -> vector<8x80xf32>
    %cst_98 = arith.constant 0.000000e+00 : f32
    %72 = vector.broadcast %cst_98 : f32 to vector<8x80xf32>
    %73 = arith.cmpf ogt, %71, %72 : vector<8x80xf32>
    %74 = vector.broadcast %70 : vector<8x1xf32> to vector<8x80xf32>
    %75 = arith.mulf %71, %74 : vector<8x80xf32>
    %76 = arith.select %73, %71, %75 : vector<8x80xi1>, vector<8x80xf32>
    %c0_99 = arith.constant 0 : index
    %c11_100 = arith.constant 11 : index
    %77 = vector.load %arg8[%c0_99, %c11_100] : memref<8x110xf32, #tpu.memory_space<vmem>>, vector<8x80xf32>
    %78 = arith.addf %76, %77 : vector<8x80xf32>
    %79 = vector.broadcast %4 : vector<1x80xf32> to vector<8x80xf32>
    %80 = arith.mulf %78, %79 : vector<8x80xf32>
    %c0_101 = arith.constant 0 : index
    %c11_102 = arith.constant 11 : index
    %81 = vector.load %arg8[%c0_101, %c11_102] : memref<8x110xf32, #tpu.memory_space<vmem>>, vector<8x80xf32>
    tpu.vector_store %arg8[%c0_101, %c11_102], %80 {strides = array<i32>} : memref<8x110xf32, #tpu.memory_space<vmem>>, vector<8x80xf32>,
    %c0_103 = arith.constant 0 : index
    %c0_104 = arith.constant 0 : index
    %82 = vector.load %arg8[%c0_103, %c0_104] : memref<8x110xf32, #tpu.memory_space<vmem>>, vector<8x80xf32>
    %c0_105 = arith.constant 0 : index
    %c0_106 = arith.constant 0 : index
    %83 = vector.load %arg10[%c0_105, %c0_106] : memref<72x80xf32, #tpu.memory_space<vmem>>, vector<8x80xf32>
    tpu.vector_store %arg10[%c0_105, %c0_106], %82 {strides = array<i32>} : memref<72x80xf32, #tpu.memory_space<vmem>>, vector<8x80xf32>,
    %c0_107 = arith.constant 0 : index
    %c1_108 = arith.constant 1 : index
    %84 = vector.load %arg8[%c0_107, %c1_108] : memref<8x110xf32, #tpu.memory_space<vmem>>, vector<8x80xf32>
    %c8_109 = arith.constant 8 : index
    %c0_110 = arith.constant 0 : index
    %85 = vector.load %arg10[%c8_109, %c0_110] : memref<72x80xf32, #tpu.memory_space<vmem>>, vector<8x80xf32>
    tpu.vector_store %arg10[%c8_109, %c0_110], %84 {strides = array<i32>} : memref<72x80xf32, #tpu.memory_space<vmem>>, vector<8x80xf32>,
    %c0_111 = arith.constant 0 : index
    %c2_112 = arith.constant 2 : index
    %86 = vector.load %arg8[%c0_111, %c2_112] : memref<8x110xf32, #tpu.memory_space<vmem>>, vector<8x80xf32>
    %c16_113 = arith.constant 16 : index
    %c0_114 = arith.constant 0 : index
    %87 = vector.load %arg10[%c16_113, %c0_114] : memref<72x80xf32, #tpu.memory_space<vmem>>, vector<8x80xf32>
    tpu.vector_store %arg10[%c16_113, %c0_114], %86 {strides = array<i32>} : memref<72x80xf32, #tpu.memory_space<vmem>>, vector<8x80xf32>,
    %c0_115 = arith.constant 0 : index
    %c10_116 = arith.constant 10 : index
    %88 = vector.load %arg8[%c0_115, %c10_116] : memref<8x110xf32, #tpu.memory_space<vmem>>, vector<8x80xf32>
    %c24_117 = arith.constant 24 : index
    %c0_118 = arith.constant 0 : index
    %89 = vector.load %arg10[%c24_117, %c0_118] : memref<72x80xf32, #tpu.memory_space<vmem>>, vector<8x80xf32>
    tpu.vector_store %arg10[%c24_117, %c0_118], %88 {strides = array<i32>} : memref<72x80xf32, #tpu.memory_space<vmem>>, vector<8x80xf32>,
    %c0_119 = arith.constant 0 : index
    %c11_120 = arith.constant 11 : index
    %90 = vector.load %arg8[%c0_119, %c11_120] : memref<8x110xf32, #tpu.memory_space<vmem>>, vector<8x80xf32>
    %c32_121 = arith.constant 32 : index
    %c0_122 = arith.constant 0 : index
    %91 = vector.load %arg10[%c32_121, %c0_122] : memref<72x80xf32, #tpu.memory_space<vmem>>, vector<8x80xf32>
    tpu.vector_store %arg10[%c32_121, %c0_122], %90 {strides = array<i32>} : memref<72x80xf32, #tpu.memory_space<vmem>>, vector<8x80xf32>,
    %c0_123 = arith.constant 0 : index
    %c12_124 = arith.constant 12 : index
    %92 = vector.load %arg8[%c0_123, %c12_124] : memref<8x110xf32, #tpu.memory_space<vmem>>, vector<8x80xf32>
    %c40_125 = arith.constant 40 : index
    %c0_126 = arith.constant 0 : index
    %93 = vector.load %arg10[%c40_125, %c0_126] : memref<72x80xf32, #tpu.memory_space<vmem>>, vector<8x80xf32>
    tpu.vector_store %arg10[%c40_125, %c0_126], %92 {strides = array<i32>} : memref<72x80xf32, #tpu.memory_space<vmem>>, vector<8x80xf32>,
    %c0_127 = arith.constant 0 : index
    %c20_128 = arith.constant 20 : index
    %94 = vector.load %arg8[%c0_127, %c20_128] : memref<8x110xf32, #tpu.memory_space<vmem>>, vector<8x80xf32>
    %c48_129 = arith.constant 48 : index
    %c0_130 = arith.constant 0 : index
    %95 = vector.load %arg10[%c48_129, %c0_130] : memref<72x80xf32, #tpu.memory_space<vmem>>, vector<8x80xf32>
    tpu.vector_store %arg10[%c48_129, %c0_130], %94 {strides = array<i32>} : memref<72x80xf32, #tpu.memory_space<vmem>>, vector<8x80xf32>,
    %c0_131 = arith.constant 0 : index
    %c21_132 = arith.constant 21 : index
    %96 = vector.load %arg8[%c0_131, %c21_132] : memref<8x110xf32, #tpu.memory_space<vmem>>, vector<8x80xf32>
    %c56_133 = arith.constant 56 : index
    %c0_134 = arith.constant 0 : index
    %97 = vector.load %arg10[%c56_133, %c0_134] : memref<72x80xf32, #tpu.memory_space<vmem>>, vector<8x80xf32>
    tpu.vector_store %arg10[%c56_133, %c0_134], %96 {strides = array<i32>} : memref<72x80xf32, #tpu.memory_space<vmem>>, vector<8x80xf32>,
    %c0_135 = arith.constant 0 : index
    %c22_136 = arith.constant 22 : index
    %98 = vector.load %arg8[%c0_135, %c22_136] : memref<8x110xf32, #tpu.memory_space<vmem>>, vector<8x80xf32>
    %c64_137 = arith.constant 64 : index
    %c0_138 = arith.constant 0 : index
    %99 = vector.load %arg10[%c64_137, %c0_138] : memref<72x80xf32, #tpu.memory_space<vmem>>, vector<8x80xf32>
    tpu.vector_store %arg10[%c64_137, %c0_138], %98 {strides = array<i32>} : memref<72x80xf32, #tpu.memory_space<vmem>>, vector<8x80xf32>,
    %c0_139 = arith.constant 0 : index
    %c0_140 = arith.constant 0 : index
    %100 = vector.load %arg10[%c0_139, %c0_140] : memref<72x80xf32, #tpu.memory_space<vmem>>, vector<72x80xf32>
    %c1_141 = arith.constant 1 : index
    %c0_142 = arith.constant 0 : index
    %c0_143 = arith.constant 0 : index
    %c0_144 = arith.constant 0 : index
    %101 = vector.load %arg4[%c1_141, %c0_142, %c0_143, %c0_144] : memref<2x2x8x72xf32, #tpu.memory_space<vmem>>, vector<1x1x8x72xf32>
    %102 = vector.shape_cast %101 : vector<1x1x8x72xf32> to vector<8x72xf32>
    %c1_145 = arith.constant 1 : index
    %c0_146 = arith.constant 0 : index
    %c0_147 = arith.constant 0 : index
    %c0_148 = arith.constant 0 : index
    %103 = vector.load %arg5[%c1_145, %c0_146, %c0_147, %c0_148] : memref<2x2x8x1xf32, #tpu.memory_space<vmem>>, vector<1x1x8x1xf32>
    %104 = vector.shape_cast %103 : vector<1x1x8x1xf32> to vector<8x1xf32>
    %cst_149 = arith.constant dense<0.000000e+00> : vector<8x80xf32>
    %105 = tpu.matmul %102, %100, %cst_149 {dimension_numbers = #tpu.dot_dimension_numbers<[1], [0], [0], [1], [0, 0, 1, 1], [], []>} : vector<8x72xf32>, vector<72x80xf32>, vector<8x80xf32> -> vector<8x80xf32>
    %cst_150 = arith.constant 0.000000e+00 : f32
    %106 = vector.broadcast %cst_150 : f32 to vector<8x80xf32>
    %107 = arith.cmpf ogt, %105, %106 : vector<8x80xf32>
    %108 = vector.broadcast %104 : vector<8x1xf32> to vector<8x80xf32>
    %109 = arith.mulf %105, %108 : vector<8x80xf32>
    %110 = arith.select %107, %105, %109 : vector<8x80xi1>, vector<8x80xf32>
    %111 = vector.broadcast %4 : vector<1x80xf32> to vector<8x80xf32>
    %112 = arith.mulf %110, %111 : vector<8x80xf32>
    %c0_151 = arith.constant 0 : index
    %c11_152 = arith.constant 11 : index
    %113 = vector.load %arg9[%c0_151, %c11_152] : memref<8x110xf32, #tpu.memory_space<vmem>>, vector<8x80xf32>
    tpu.vector_store %arg9[%c0_151, %c11_152], %112 {strides = array<i32>} : memref<8x110xf32, #tpu.memory_space<vmem>>, vector<8x80xf32>,
    %c0_153 = arith.constant 0 : index
    %c0_154 = arith.constant 0 : index
    %114 = vector.load %arg9[%c0_153, %c0_154] : memref<8x110xf32, #tpu.memory_space<vmem>>, vector<8x80xf32>
    %c0_155 = arith.constant 0 : index
    %c0_156 = arith.constant 0 : index
    %115 = vector.load %arg10[%c0_155, %c0_156] : memref<72x80xf32, #tpu.memory_space<vmem>>, vector<8x80xf32>
    tpu.vector_store %arg10[%c0_155, %c0_156], %114 {strides = array<i32>} : memref<72x80xf32, #tpu.memory_space<vmem>>, vector<8x80xf32>,
    %c0_157 = arith.constant 0 : index
    %c1_158 = arith.constant 1 : index
    %116 = vector.load %arg9[%c0_157, %c1_158] : memref<8x110xf32, #tpu.memory_space<vmem>>, vector<8x80xf32>
    %c8_159 = arith.constant 8 : index
    %c0_160 = arith.constant 0 : index
    %117 = vector.load %arg10[%c8_159, %c0_160] : memref<72x80xf32, #tpu.memory_space<vmem>>, vector<8x80xf32>
    tpu.vector_store %arg10[%c8_159, %c0_160], %116 {strides = array<i32>} : memref<72x80xf32, #tpu.memory_space<vmem>>, vector<8x80xf32>,
    %c0_161 = arith.constant 0 : index
    %c2_162 = arith.constant 2 : index
    %118 = vector.load %arg9[%c0_161, %c2_162] : memref<8x110xf32, #tpu.memory_space<vmem>>, vector<8x80xf32>
    %c16_163 = arith.constant 16 : index
    %c0_164 = arith.constant 0 : index
    %119 = vector.load %arg10[%c16_163, %c0_164] : memref<72x80xf32, #tpu.memory_space<vmem>>, vector<8x80xf32>
    tpu.vector_store %arg10[%c16_163, %c0_164], %118 {strides = array<i32>} : memref<72x80xf32, #tpu.memory_space<vmem>>, vector<8x80xf32>,
    %c0_165 = arith.constant 0 : index
    %c10_166 = arith.constant 10 : index
    %120 = vector.load %arg9[%c0_165, %c10_166] : memref<8x110xf32, #tpu.memory_space<vmem>>, vector<8x80xf32>
    %c24_167 = arith.constant 24 : index
    %c0_168 = arith.constant 0 : index
    %121 = vector.load %arg10[%c24_167, %c0_168] : memref<72x80xf32, #tpu.memory_space<vmem>>, vector<8x80xf32>
    tpu.vector_store %arg10[%c24_167, %c0_168], %120 {strides = array<i32>} : memref<72x80xf32, #tpu.memory_space<vmem>>, vector<8x80xf32>,
    %c0_169 = arith.constant 0 : index
    %c11_170 = arith.constant 11 : index
    %122 = vector.load %arg9[%c0_169, %c11_170] : memref<8x110xf32, #tpu.memory_space<vmem>>, vector<8x80xf32>
    %c32_171 = arith.constant 32 : index
    %c0_172 = arith.constant 0 : index
    %123 = vector.load %arg10[%c32_171, %c0_172] : memref<72x80xf32, #tpu.memory_space<vmem>>, vector<8x80xf32>
    tpu.vector_store %arg10[%c32_171, %c0_172], %122 {strides = array<i32>} : memref<72x80xf32, #tpu.memory_space<vmem>>, vector<8x80xf32>,
    %c0_173 = arith.constant 0 : index
    %c12_174 = arith.constant 12 : index
    %124 = vector.load %arg9[%c0_173, %c12_174] : memref<8x110xf32, #tpu.memory_space<vmem>>, vector<8x80xf32>
    %c40_175 = arith.constant 40 : index
    %c0_176 = arith.constant 0 : index
    %125 = vector.load %arg10[%c40_175, %c0_176] : memref<72x80xf32, #tpu.memory_space<vmem>>, vector<8x80xf32>
    tpu.vector_store %arg10[%c40_175, %c0_176], %124 {strides = array<i32>} : memref<72x80xf32, #tpu.memory_space<vmem>>, vector<8x80xf32>,
    %c0_177 = arith.constant 0 : index
    %c20_178 = arith.constant 20 : index
    %126 = vector.load %arg9[%c0_177, %c20_178] : memref<8x110xf32, #tpu.memory_space<vmem>>, vector<8x80xf32>
    %c48_179 = arith.constant 48 : index
    %c0_180 = arith.constant 0 : index
    %127 = vector.load %arg10[%c48_179, %c0_180] : memref<72x80xf32, #tpu.memory_space<vmem>>, vector<8x80xf32>
    tpu.vector_store %arg10[%c48_179, %c0_180], %126 {strides = array<i32>} : memref<72x80xf32, #tpu.memory_space<vmem>>, vector<8x80xf32>,
    %c0_181 = arith.constant 0 : index
    %c21_182 = arith.constant 21 : index
    %128 = vector.load %arg9[%c0_181, %c21_182] : memref<8x110xf32, #tpu.memory_space<vmem>>, vector<8x80xf32>
    %c56_183 = arith.constant 56 : index
    %c0_184 = arith.constant 0 : index
    %129 = vector.load %arg10[%c56_183, %c0_184] : memref<72x80xf32, #tpu.memory_space<vmem>>, vector<8x80xf32>
    tpu.vector_store %arg10[%c56_183, %c0_184], %128 {strides = array<i32>} : memref<72x80xf32, #tpu.memory_space<vmem>>, vector<8x80xf32>,
    %c0_185 = arith.constant 0 : index
    %c22_186 = arith.constant 22 : index
    %130 = vector.load %arg9[%c0_185, %c22_186] : memref<8x110xf32, #tpu.memory_space<vmem>>, vector<8x80xf32>
    %c64_187 = arith.constant 64 : index
    %c0_188 = arith.constant 0 : index
    %131 = vector.load %arg10[%c64_187, %c0_188] : memref<72x80xf32, #tpu.memory_space<vmem>>, vector<8x80xf32>
    tpu.vector_store %arg10[%c64_187, %c0_188], %130 {strides = array<i32>} : memref<72x80xf32, #tpu.memory_space<vmem>>, vector<8x80xf32>,
    %c0_189 = arith.constant 0 : index
    %c0_190 = arith.constant 0 : index
    %132 = vector.load %arg10[%c0_189, %c0_190] : memref<72x80xf32, #tpu.memory_space<vmem>>, vector<72x80xf32>
    %c1_191 = arith.constant 1 : index
    %c1_192 = arith.constant 1 : index
    %c0_193 = arith.constant 0 : index
    %c0_194 = arith.constant 0 : index
    %133 = vector.load %arg4[%c1_191, %c1_192, %c0_193, %c0_194] : memref<2x2x8x72xf32, #tpu.memory_space<vmem>>, vector<1x1x8x72xf32>
    %134 = vector.shape_cast %133 : vector<1x1x8x72xf32> to vector<8x72xf32>
    %c1_195 = arith.constant 1 : index
    %c1_196 = arith.constant 1 : index
    %c0_197 = arith.constant 0 : index
    %c0_198 = arith.constant 0 : index
    %135 = vector.load %arg5[%c1_195, %c1_196, %c0_197, %c0_198] : memref<2x2x8x1xf32, #tpu.memory_space<vmem>>, vector<1x1x8x1xf32>
    %136 = vector.shape_cast %135 : vector<1x1x8x1xf32> to vector<8x1xf32>
    %cst_199 = arith.constant dense<0.000000e+00> : vector<8x80xf32>
    %137 = tpu.matmul %134, %132, %cst_199 {dimension_numbers = #tpu.dot_dimension_numbers<[1], [0], [0], [1], [0, 0, 1, 1], [], []>} : vector<8x72xf32>, vector<72x80xf32>, vector<8x80xf32> -> vector<8x80xf32>
    %cst_200 = arith.constant 0.000000e+00 : f32
    %138 = vector.broadcast %cst_200 : f32 to vector<8x80xf32>
    %139 = arith.cmpf ogt, %137, %138 : vector<8x80xf32>
    %140 = vector.broadcast %136 : vector<8x1xf32> to vector<8x80xf32>
    %141 = arith.mulf %137, %140 : vector<8x80xf32>
    %142 = arith.select %139, %137, %141 : vector<8x80xi1>, vector<8x80xf32>
    %c0_201 = arith.constant 0 : index
    %c11_202 = arith.constant 11 : index
    %143 = vector.load %arg8[%c0_201, %c11_202] : memref<8x110xf32, #tpu.memory_space<vmem>>, vector<8x80xf32>
    %144 = arith.addf %142, %143 : vector<8x80xf32>
    %c0_203 = arith.constant 0 : index
    %c0_204 = arith.constant 0 : index
    %c0_205 = arith.constant 0 : index
    %145 = vector.load %arg7[%c0_203, %c0_204, %c0_205] : memref<1x8x80xf32, #tpu.memory_space<vmem>>, vector<1x8x80xf32>
    %146 = vector.shape_cast %145 : vector<1x8x80xf32> to vector<8x80xf32>
    %147 = vector.shape_cast %144 : vector<8x80xf32> to vector<1x8x80xf32>
    tpu.vector_store %arg7[%c0_203, %c0_204, %c0_205], %147 {strides = array<i32>} : memref<1x8x80xf32, #tpu.memory_space<vmem>>, vector<1x8x80xf32>,
    return
  }
  func.func @transform_0(%arg0: i32) -> (i32, i32, i32) {
    %c0_i32 = arith.constant 0 : i32
    %c0_i32_0 = arith.constant 0 : i32
    %c0_i32_1 = arith.constant 0 : i32
    return %arg0, %c0_i32, %c0_i32_0 : i32, i32, i32
  }
  func.func @transform_1(%arg0: i32) -> (i32, i32) {
    %c0_i32 = arith.constant 0 : i32
    %c0_i32_0 = arith.constant 0 : i32
    %c0_i32_1 = arith.constant 0 : i32
    return %c0_i32, %c0_i32_0 : i32, i32
  }
  func.func @transform_2(%arg0: i32) -> (i32, i32) {
    %c0_i32 = arith.constant 0 : i32
    %c0_i32_0 = arith.constant 0 : i32
    %c0_i32_1 = arith.constant 0 : i32
    return %c0_i32, %c0_i32_0 : i32, i32
  }
  func.func @transform_3(%arg0: i32) -> (i32, i32, i32, i32) {
    %c0_i32 = arith.constant 0 : i32
    %c0_i32_0 = arith.constant 0 : i32
    %c0_i32_1 = arith.constant 0 : i32
    %c0_i32_2 = arith.constant 0 : i32
    %c0_i32_3 = arith.constant 0 : i32
    return %c0_i32, %c0_i32_0, %c0_i32_1, %c0_i32_2 : i32, i32, i32, i32
  }
  func.func @transform_4(%arg0: i32) -> (i32, i32, i32, i32) {
    %c0_i32 = arith.constant 0 : i32
    %c0_i32_0 = arith.constant 0 : i32
    %c0_i32_1 = arith.constant 0 : i32
    %c0_i32_2 = arith.constant 0 : i32
    %c0_i32_3 = arith.constant 0 : i32
    return %c0_i32, %c0_i32_0, %c0_i32_1, %c0_i32_2 : i32, i32, i32, i32
  }
  func.func @transform_5(%arg0: i32) -> (i32, i32) {
    %c0_i32 = arith.constant 0 : i32
    %c0_i32_0 = arith.constant 0 : i32
    %c0_i32_1 = arith.constant 0 : i32
    return %c0_i32, %c0_i32_0 : i32, i32
  }
  func.func @transform_6(%arg0: i32) -> (i32, i32, i32) {
    %c0_i32 = arith.constant 0 : i32
    %c0_i32_0 = arith.constant 0 : i32
    %c0_i32_1 = arith.constant 0 : i32
    return %arg0, %c0_i32, %c0_i32_0 : i32, i32, i32
  }
}

</mosaic_0001>

<llo_original>
// kernel: basic_block_forward.1
$region0: #{basic_block_forward.1}
  #allocation0 [shape = 'u32[]', space=smem, size = 0x4, offset = 0x4, fixed_abs, tag = 'smem constant byte address 0x4 - core index']
  #allocation1 [shape = 'u32[144,128]{1,0:T(1,128)}', space=vmem, size = 0x12000, scoped, tag = 'internal scratch']
  #allocation2 [shape = 'f32[8,110]{1,0:T(8,128)}', space=vmem, size = 0x1000, scoped, tag = 'scratch operand']
  #allocation3 [shape = 'f32[8,110]{1,0:T(8,128)}', space=vmem, size = 0x1000, scoped, tag = 'scratch operand']
  #allocation4 [shape = 'f32[72,80]{1,0:T(8,128)}', space=vmem, size = 0x9000, scoped, tag = 'scratch operand']
  %s0 = inlined_call_operand.vmem [shape: f32[2,36,80], index: 0, kind: input, shape index: {}]
  %s1 = inlined_call_operand.vmem [shape: f32[8,36], index: 1, kind: input, shape index: {}]
  %s2 = inlined_call_operand.vmem [shape: f32[8,1], index: 2, kind: input, shape index: {}]
  %s3 = inlined_call_operand.vmem [shape: f32[2,2,8,72], index: 3, kind: input, shape index: {}]
  %s4 = inlined_call_operand.vmem [shape: f32[2,2,8,1], index: 4, kind: input, shape index: {}]
  %s5 = inlined_call_operand.vmem [shape: f32[1,80], index: 5, kind: input, shape index: {}]
  %s6 = inlined_call_operand.vmem [shape: f32[2,8,80], index: 6, kind: output, shape index: {}]
  %s7 = sld [smem:[#allocation0]]
  $region57: #{basic_block_forward.1} parent=0
    _
  %s9 = ssub.s32 1, %s7
  %s10 = scalar_select 0, %s9, %s7
  loop: start=0, step=1, limit=4
  $region2: #{basic_block_forward.1} parent=0 // loop_pre_header
    _
  $region3: #{basic_block_forward.1} parent=0 // loop_header
    %s12 = sphi 0, %s16
    %p13 = scmp.ge.s32.totalorder %s12, 4
    %s22 = sphi 0, %s24
    %s25 = sphi 0, %s22
    %s26 = sphi 0, %s25
    %s42 = sphi 0, %s26
    %s46 = sphi 0, %s46
    %s48 = sphi 0, %s46
    %s49 = sphi 0, %s48
    %s63 = sphi 0, %s49
    %s67 = sphi 0, %s67
    %s69 = sphi 0, %s67
    %s70 = sphi 0, %s69
    %s84 = sphi 0, %s70
    %s88 = sphi 0, %s88
    %s90 = sphi 0, %s88
    %s91 = sphi 0, %s90
    %s105 = sphi 0, %s91
    %s109 = sphi 0, %s109
    %s111 = sphi 0, %s109
    %s112 = sphi 0, %s111
    %s126 = sphi 0, %s112
    %s130 = sphi 0, %s130
    %s132 = sphi 0, %s130
    %s133 = sphi 0, %s132
    %s147 = sphi 0, %s133
    %s153 = sphi 0, %s155
    %s156 = sphi 0, %s153
    %s157 = sphi 0, %s156
    %s173 = sphi 0, %s157
  $region4: #{basic_block_forward.1} parent=0 // loop_header_branch
    %15 = sbr.rel (%p13) target = $region8
  $region5: #{basic_block_forward.1} parent=0 // loop_body
    %s17 = ssub.s32 %s12, 1
    %s18 = ssub.s32 %s12, 2
    %s19 = sadd.s32 %s12, 1
    %s20 = ssub.s32 %s12, %s19
    %p21 = scmp.eq.s32.totalorder %s20, 0
    %s23 = sadd.s32 %s22, 1
    %s24 = scalar_select %p21, %s22, %s23
    %p27 = pneg %p21
    %p28 = scmp.eq.s32.totalorder %s12, 1
    %p29 = por %p27, %p28
    %p30 = scmp.ne.s32.totalorder %s22, %s25
    %p31 = scmp.eq.s32.totalorder %s12, 0
    %p32 = por %p30, %p31
    %p33 = scmp.ne.s32.totalorder %s22, %s25
    %p34 = scmp.eq.s32.totalorder %s17, 1
    %p35 = por %p33, %p34
    %p36 = scmp.ne.s32.totalorder %s25, %s26
    %p37 = scmp.eq.s32.totalorder %s17, 0
    %p38 = por %p36, %p37
    %p39 = scmp.ne.s32.totalorder %s25, %s26
    %p40 = scmp.eq.s32.totalorder %s18, 1
    %p41 = por %p39, %p40
    %p43 = scmp.ne.s32.totalorder %s26, %s42
    %p44 = scmp.eq.s32.totalorder %s18, 0
    %p45 = por %p43, %p44
    %s47 = sadd.s32 %s46, 1
    %p50 = scmp.eq.s32.totalorder %s12, 1
    %p51 = scmp.ne.s32.totalorder %s46, %s48
    %p52 = scmp.eq.s32.totalorder %s12, 0
    %p53 = por %p51, %p52
    %p54 = scmp.ne.s32.totalorder %s46, %s48
    %p55 = scmp.eq.s32.totalorder %s17, 1
    %p56 = por %p54, %p55
    %p57 = scmp.ne.s32.totalorder %s48, %s49
    %p58 = scmp.eq.s32.totalorder %s17, 0
    %p59 = por %p57, %p58
    %p60 = scmp.ne.s32.totalorder %s48, %s49
    %p61 = scmp.eq.s32.totalorder %s18, 1
    %p62 = por %p60, %p61
    %p64 = scmp.ne.s32.totalorder %s49, %s63
    %p65 = scmp.eq.s32.totalorder %s18, 0
    %p66 = por %p64, %p65
    %s68 = sadd.s32 %s67, 1
    %p71 = scmp.eq.s32.totalorder %s12, 1
    %p72 = scmp.ne.s32.totalorder %s67, %s69
    %p73 = scmp.eq.s32.totalorder %s12, 0
    %p74 = por %p72, %p73
    %p75 = scmp.ne.s32.totalorder %s67, %s69
    %p76 = scmp.eq.s32.totalorder %s17, 1
    %p77 = por %p75, %p76
    %p78 = scmp.ne.s32.totalorder %s69, %s70
    %p79 = scmp.eq.s32.totalorder %s17, 0
    %p80 = por %p78, %p79
    %p81 = scmp.ne.s32.totalorder %s69, %s70
    %p82 = scmp.eq.s32.totalorder %s18, 1
    %p83 = por %p81, %p82
    %p85 = scmp.ne.s32.totalorder %s70, %s84
    %p86 = scmp.eq.s32.totalorder %s18, 0
    %p87 = por %p85, %p86
    %s89 = sadd.s32 %s88, 1
    %p92 = scmp.eq.s32.totalorder %s12, 1
    %p93 = scmp.ne.s32.totalorder %s88, %s90
    %p94 = scmp.eq.s32.totalorder %s12, 0
    %p95 = por %p93, %p94
    %p96 = scmp.ne.s32.totalorder %s88, %s90
    %p97 = scmp.eq.s32.totalorder %s17, 1
    %p98 = por %p96, %p97
    %p99 = scmp.ne.s32.totalorder %s90, %s91
    %p100 = scmp.eq.s32.totalorder %s17, 0
    %p101 = por %p99, %p100
    %p102 = scmp.ne.s32.totalorder %s90, %s91
    %p103 = scmp.eq.s32.totalorder %s18, 1
    %p104 = por %p102, %p103
    %p106 = scmp.ne.s32.totalorder %s91, %s105
    %p107 = scmp.eq.s32.totalorder %s18, 0
    %p108 = por %p106, %p107
    %s110 = sadd.s32 %s109, 1
    %p113 = scmp.eq.s32.totalorder %s12, 1
    %p114 = scmp.ne.s32.totalorder %s109, %s111
    %p115 = scmp.eq.s32.totalorder %s12, 0
    %p116 = por %p114, %p115
    %p117 = scmp.ne.s32.totalorder %s109, %s111
    %p118 = scmp.eq.s32.totalorder %s17, 1
    %p119 = por %p117, %p118
    %p120 = scmp.ne.s32.totalorder %s111, %s112
    %p121 = scmp.eq.s32.totalorder %s17, 0
    %p122 = por %p120, %p121
    %p123 = scmp.ne.s32.totalorder %s111, %s112
    %p124 = scmp.eq.s32.totalorder %s18, 1
    %p125 = por %p123, %p124
    %p127 = scmp.ne.s32.totalorder %s112, %s126
    %p128 = scmp.eq.s32.totalorder %s18, 0
    %p129 = por %p127, %p128
    %s131 = sadd.s32 %s130, 1
    %p134 = scmp.eq.s32.totalorder %s12, 1
    %p135 = scmp.ne.s32.totalorder %s130, %s132
    %p136 = scmp.eq.s32.totalorder %s12, 0
    %p137 = por %p135, %p136
    %p138 = scmp.ne.s32.totalorder %s130, %s132
    %p139 = scmp.eq.s32.totalorder %s17, 1
    %p140 = por %p138, %p139
    %p141 = scmp.ne.s32.totalorder %s132, %s133
    %p142 = scmp.eq.s32.totalorder %s17, 0
    %p143 = por %p141, %p142
    %p144 = scmp.ne.s32.totalorder %s132, %s133
    %p145 = scmp.eq.s32.totalorder %s18, 1
    %p146 = por %p144, %p145
    %p148 = scmp.ne.s32.totalorder %s133, %s147
    %p149 = scmp.eq.s32.totalorder %s18, 0
    %p150 = por %p148, %p149
    %s151 = ssub.s32 %s12, %s19
    %p152 = scmp.eq.s32.totalorder %s151, 0
    %s154 = sadd.s32 %s153, 1
    %s155 = scalar_select %p152, %s153, %s154
    %p158 = pneg %p152
    %p159 = scmp.eq.s32.totalorder %s12, 1
    %p160 = por %p158, %p159
    %p161 = scmp.ne.s32.totalorder %s153, %s156
    %p162 = scmp.eq.s32.totalorder %s12, 0
    %p163 = por %p161, %p162
    %p164 = scmp.ne.s32.totalorder %s153, %s156
    %p165 = scmp.eq.s32.totalorder %s17, 1
    %p166 = por %p164, %p165
    %p167 = scmp.ne.s32.totalorder %s156, %s157
    %p168 = scmp.eq.s32.totalorder %s17, 0
    %p169 = por %p167, %p168
    %p170 = scmp.ne.s32.totalorder %s156, %s157
    %p171 = scmp.eq.s32.totalorder %s18, 1
    %p172 = por %p170, %p171
    %p174 = scmp.ne.s32.totalorder %s157, %s173
    %p175 = scmp.eq.s32.totalorder %s18, 0
    %p176 = por %p174, %p175
    %p177 = scmp.le.s32.totalorder 1, %s12
    %p178 = scmp.lt.s32.totalorder %s12, 3
    %p179 = pnand %p177, %p178
    %p180 = pneg %p179
    // Predicated region
    $region9: #{basic_block_forward.1} parent=5 // pred_check
      _
    $region10: #{basic_block_forward.1} parent=5 // pred_check_branch
      %182 = sbr.rel (%p179) target = $region12
    $region11: #{basic_block_forward.1} parent=5 // pred_region
      %s183 = ssub.s32 %s12, 1
      // Predicated region
      $region13: #{basic_block_forward.1} parent=11 // pred_check
        %p184 = pneg %p59
      $region14: #{basic_block_forward.1} parent=11 // pred_check_branch
        %186 = sbr.rel (%p184) target = $region16
      $region15: #{basic_block_forward.1} parent=11 // pred_region
        _
      $region16: #{basic_block_forward.1} parent=11 // pred_fallthru
        _
      // Predicated region
      $region17: #{basic_block_forward.1} parent=11 // pred_check
        %p187 = pneg %p80
      $region18: #{basic_block_forward.1} parent=11 // pred_check_branch
        %189 = sbr.rel (%p187) target = $region20
      $region19: #{basic_block_forward.1} parent=11 // pred_region
        _
      $region20: #{basic_block_forward.1} parent=11 // pred_fallthru
        _
      // Predicated region
      $region21: #{basic_block_forward.1} parent=11 // pred_check
        %p190 = pneg %p101
      $region22: #{basic_block_forward.1} parent=11 // pred_check_branch
        %192 = sbr.rel (%p190) target = $region24
      $region23: #{basic_block_forward.1} parent=11 // pred_region
        _
      $region24: #{basic_block_forward.1} parent=11 // pred_fallthru
        _
      // Predicated region
      $region25: #{basic_block_forward.1} parent=11 // pred_check
        %p193 = pneg %p122
      $region26: #{basic_block_forward.1} parent=11 // pred_check_branch
        %195 = sbr.rel (%p193) target = $region28
      $region27: #{basic_block_forward.1} parent=11 // pred_region
        _
      $region28: #{basic_block_forward.1} parent=11 // pred_fallthru
        _
      // Predicated region
      $region29: #{basic_block_forward.1} parent=11 // pred_check
        %p196 = pneg %p143
      $region30: #{basic_block_forward.1} parent=11 // pred_check_branch
        %198 = sbr.rel (%p196) target = $region32
      $region31: #{basic_block_forward.1} parent=11 // pred_region
        _
      $region32: #{basic_block_forward.1} parent=11 // pred_fallthru
        _
    $region12: #{basic_block_forward.1} parent=5 // pred_fallthru
      _
    %p199 = scmp.lt.s32.totalorder %s12, 2
    // Predicated region
    $region33: #{basic_block_forward.1} parent=5 // pred_check
      %p200 = pneg %p199
    $region34: #{basic_block_forward.1} parent=5 // pred_check_branch
      %202 = sbr.rel (%p200) target = $region36
    $region35: #{basic_block_forward.1} parent=5 // pred_region
      // Predicated region
      $region37: #{basic_block_forward.1} parent=35 // pred_check
        %p203 = pneg %p32
      $region38: #{basic_block_forward.1} parent=35 // pred_check_branch
        %205 = sbr.rel (%p203) target = $region40
      $region39: #{basic_block_forward.1} parent=35 // pred_region
        %p206 = scmp.lt.s32.totalorder %s12, 1
        %s207 = scalar_select %p206, %s12, 1
        %s208 = smul.addr %s207, 5
        %s209 = smul.addr %s208, 8
        %s210 = scalar_lea.vmem %s0, %s209
      $region40: #{basic_block_forward.1} parent=35 // pred_fallthru
        _
    $region36: #{basic_block_forward.1} parent=5 // pred_fallthru
      _
    %p211 = scmp.le.s32.totalorder 1, %s12
    %p212 = scmp.lt.s32.totalorder %s12, 3
    %p213 = pnand %p211, %p212
    %p214 = pneg %p213
    // Predicated region
    $region41: #{basic_block_forward.1} parent=5 // pred_check
      _
    $region42: #{basic_block_forward.1} parent=5 // pred_check_branch
      %216 = sbr.rel (%p213) target = $region44
    $region43: #{basic_block_forward.1} parent=5 // pred_region
      %s217 = ssub.s32 %s12, 1
      %p218 = scmp.lt.s32.totalorder %s17, 1
      %s219 = scalar_select %p218, %s17, 1
      %s220 = smul.addr %s219, 5
      %s221 = smul.addr %s220, 8
      %s222 = scalar_lea.vmem %s0, %s221
      %p223 = pneg %p38
      %p224 = pneg %p35
      %p225 = pneg %p59
      %p226 = pneg %p56
      %p227 = pneg %p80
      %p228 = pneg %p77
      %p229 = pneg %p101
      %p230 = pneg %p98
      %p231 = pneg %p122
      %p232 = pneg %p119
      %p233 = pneg %p143
      %p234 = pneg %p140
      %p235 = pneg %p169
      %p236 = pneg %p166
      %p237 = scmp.lt.s32.totalorder %s17, 1
      %s238 = scalar_select %p237, %s17, 1
      %s239 = smul.addr %s238, 8
      %s240 = scalar_lea.vmem %s6, %s239
      %p241 = scmp.lt.s32.totalorder %s17, 1
      %s242 = scalar_select %p241, %s17, 1
      %s243 = smul.addr %s242, 5
      %s244 = smul.addr %s243, 8
      %s245 = scalar_lea.vmem %s0, %s244
      %p246 = scmp.lt.s32.totalorder %s17, 1
      %s247 = scalar_select %p246, %s17, 1
      %s248 = smul.addr %s247, 8
      %s249 = scalar_lea.vmem %s6, %s248
      %vm250 = vcmask 900096
      %251 = vst.msk [vmem:[#allocation2] sm:$0xff] %vm250, 0.0
      %252 = vst.msk [vmem:[#allocation3] sm:$0xff] %vm250, 0.0
      %v253 = vld [vmem:[%s5] sm:$0x1]
      %v254 = vld [vmem:[%s245] sm:$0xff]
      %v255 = vld [vmem:[%s245 + $0x8] sm:$0xff]
      %v256 = vld [vmem:[%s245 + $0x10] sm:$0xff]
      %v257 = vld [vmem:[%s245 + $0x18] sm:$0xff]
      %v258 = vld [vmem:[%s245 + $0x20] sm:$0xf]
      %v259 = vld [vmem:[%s1] sm:$0xff]
      %v260 = vld [vmem:[%s2] sm:$0xff]
      %vm261 = vcmask 293888
      %v263 = vsel %vm261, %v259, 0
      %vm265 = vcmask 1043456
      %v267 = vsel %vm265, %v258, 0
      %269 = vmatprep.subr.mxu0 0.0
      %270 = vmatpush1.msra.mxu0 %v254
      %271 = vmatprep.subr.mxu0 0.0
      %272 = vmatpush1.msra.mxu0 %v255
      %273 = vmatprep.subr.mxu0 0.0
      %274 = vmatpush1.msra.mxu0 %v256
      %275 = vmatprep.subr.mxu0 0.0
      %276 = vmatpush1.msra.mxu0 %v257
      %277 = vmatprep.subr.mxu0 0.0
      %278 = vmatpush1.msra.mxu0 %v267
      %279 = vmatprep.subr.mxu0 0.0
      %280 = vmatpush1.msra.mxu0 0.0
      %281 = vmatprep.subr.mxu0 0.0
      %282 = vmatpush1.msra.mxu0 0.0
      %283 = vmatprep.subr.mxu0 0.0
      %284 = vmatpush1.msra.mxu0 0.0
      %285 = vmatprep.subr.mxu0 0.0
      %286 = vmatpush1.msra.mxu0 0.0
      %287 = vmatprep.subr.mxu0 0.0
      %288 = vmatpush1.msra.mxu0 0.0
      %289 = vmatprep.subr.mxu0 0.0
      %290 = vmatpush1.msra.mxu0 0.0
      %291 = vmatprep.subr.mxu0 0.0
      %292 = vmatpush1.msra.mxu0 0.0
      %293 = vmatprep.subr.mxu0 0.0
      %294 = vmatpush1.msra.mxu0 0.0
      %295 = vmatprep.subr.mxu0 0.0
      %296 = vmatpush1.msra.mxu0 0.0
      %297 = vmatprep.subr.mxu0 0.0
      %298 = vmatpush1.msra.mxu0 0.0
      %299 = vmatprep.subr.mxu0 0.0
      %300 = vmatpush1.msra.mxu0 0.0
      %301 = vmatprep.subr.mxu0 0.0
      %302 = vmatpush1.msra.mxu0 0.0
      %303 = vmatprep.subr.mxu0 0.0
      %304 = vmatpush1.msra.mxu0 0.0
      %305 = vmatprep.subr.mxu0 0.0
      %306 = vmatpush1.msra.mxu0 0.0
      %307 = vmatprep.subr.mxu0 0.0
      %308 = vmatpush1.msra.mxu0 0.0
      %309 = vmatprep.subr.mxu0 0.0
      %310 = vmatpush1.msra.mxu0 0.0
      %311 = vmatprep.subr.mxu0 0.0
      %312 = vmatpush1.msra.mxu0 0.0
      %313 = vmatprep.subr.mxu0 0.0
      %314 = vmatpush1.msra.mxu0 0.0
      %315 = vmatprep.subr.mxu0 0.0
      %316 = vmatpush1.msra.mxu0 0.0
      %317 = vmatprep.subr.mxu0 0.0
      %318 = vmatpush1.msra.mxu0 0.0
      %319 = vmatprep.subr.mxu0 0.0
      %320 = vmatpush1.msra.mxu0 0.0
      %321 = vmatprep.subr.mxu0 0.0
      %322 = vmatpush1.msra.mxu0 0.0
      %323 = vmatprep.subr.mxu0 0.0
      %324 = vmatpush1.msra.mxu0 0.0
      %325 = vmatprep.subr.mxu0 0.0
      %326 = vmatpush1.msra.mxu0 0.0
      %327 = vmatprep.subr.mxu0 0.0
      %328 = vmatpush1.msra.mxu0 0.0
      %329 = vmatprep.subr.mxu0 0.0
      %330 = vmatpush1.msra.mxu0 0.0
      %331 = vmatprep.subr.mxu0 0.0
      %332 = vmatpush1.msra.mxu0 0.0
      %333 = vmatprep.mubr.f32.mxu0 0.0
      %334 = vmatmul.mubr.f32.gmra.mrb[0].mxu0 %v263
      %v335 = vpop.f32.mrb[0].mxu0
      %v336 = vadd.f32 0.0, %v335
      %v337 = vpop.f32.mrb[0].mxu0
      %338 = vdwg.mxu0
      %vm339 = vcmp.gt.f32.partialorder %v336, 0.0
      %341 = vset.pattern.permute.xlu0 0
      %342 = vperm.xlu0 %341, %v260
      %v343 = vpop.permute.xlu0 %342
      %v345 = vmul.f32 %v336, %v343
      %v346 = vsel %vm339, %v336, %v345
      %348 = vrot.lane.b32.xlu0 %v346, 11
      %v349 = vpop.permute.xlu0 %348
      %vm351 = vcmask 744536
      %352 = vst.msk [vmem:[#allocation2] sm:$0xff] %vm351, %v349
      %v353 = vld [vmem:[#allocation2] sm:$0xff]
      %vm354 = vcmask 654336
      %355 = vst.msk [vmem:[#allocation4] sm:$0xff] %vm354, %v353
      %v356 = vld [vmem:[#allocation2] sm:$0xff]
      %358 = vrot.lane.b32.xlu0 %v356, 127
      %v359 = vpop.permute.xlu0 %358
      %361 = vst.msk [vmem:[#allocation4 + $0x8] sm:$0xff] %vm354, %v359
      %v362 = vld [vmem:[#allocation2] sm:$0xff]
      %364 = vrot.lane.b32.xlu0 %v362, 126
      %v365 = vpop.permute.xlu0 %364
      %367 = vst.msk [vmem:[#allocation4 + $0x10] sm:$0xff] %vm354, %v365
      %v368 = vld [vmem:[#allocation2] sm:$0xff]
      %370 = vrot.lane.b32.xlu0 %v368, 118
      %v371 = vpop.permute.xlu0 %370
      %373 = vst.msk [vmem:[#allocation4 + $0x18] sm:$0xff] %vm354, %v371
      %v374 = vld [vmem:[#allocation2] sm:$0xff]
      %376 = vrot.lane.b32.xlu0 %v374, 117
      %v377 = vpop.permute.xlu0 %376
      %379 = vst.msk [vmem:[#allocation4 + $0x20] sm:$0xff] %vm354, %v377
      %v380 = vld [vmem:[#allocation2] sm:$0xff]
      %382 = vrot.lane.b32.xlu0 %v380, 116
      %v383 = vpop.permute.xlu0 %382
      %385 = vst.msk [vmem:[#allocation4 + $0x28] sm:$0xff] %vm354, %v383
      %v386 = vld [vmem:[#allocation2] sm:$0xff]
      %388 = vrot.lane.b32.xlu0 %v386, 108
      %v389 = vpop.permute.xlu0 %388
      %391 = vst.msk [vmem:[#allocation4 + $0x30] sm:$0xff] %vm354, %v389
      %v392 = vld [vmem:[#allocation2] sm:$0xff]
      %394 = vrot.lane.b32.xlu0 %v392, 107
      %v395 = vpop.permute.xlu0 %394
      %397 = vst.msk [vmem:[#allocation4 + $0x38] sm:$0xff] %vm354, %v395
      %v398 = vld [vmem:[#allocation2] sm:$0xff]
      %400 = vrot.lane.b32.xlu0 %v398, 106
      %v401 = vpop.permute.xlu0 %400
      %403 = vst.msk [vmem:[#allocation4 + $0x40] sm:$0xff] %vm354, %v401
      %v404 = vld [vmem:[#allocation4] sm:$0xff]
      %v405 = vld [vmem:[#allocation4 + $0x8] sm:$0xff]
      %v406 = vld [vmem:[#allocation4 + $0x10] sm:$0xff]
      %v407 = vld [vmem:[#allocation4 + $0x18] sm:$0xff]
      %v408 = vld [vmem:[#allocation4 + $0x20] sm:$0xff]
      %v409 = vld [vmem:[#allocation4 + $0x28] sm:$0xff]
      %v410 = vld [vmem:[#allocation4 + $0x30] sm:$0xff]
      %v411 = vld [vmem:[#allocation4 + $0x38] sm:$0xff]
      %v412 = vld [vmem:[#allocation4 + $0x40] sm:$0xff]
      %v413 = vld [vmem:[%s3] sm:$0xff]
      %v414 = vld [vmem:[%s4] sm:$0xff]
      %vm415 = vcmask 588800
      %v417 = vsel %vm415, %v413, 0
      %419 = vmatprep.subr.mxu0 0.0
      %420 = vmatpush1.msra.mxu0 %v404
      %421 = vmatprep.subr.mxu0 0.0
      %422 = vmatpush1.msra.mxu0 %v405
      %423 = vmatprep.subr.mxu0 0.0
      %424 = vmatpush1.msra.mxu0 %v406
      %425 = vmatprep.subr.mxu0 0.0
      %426 = vmatpush1.msra.mxu0 %v407
      %427 = vmatprep.subr.mxu0 0.0
      %428 = vmatpush1.msra.mxu0 %v408
      %429 = vmatprep.subr.mxu0 0.0
      %430 = vmatpush1.msra.mxu0 %v409
      %431 = vmatprep.subr.mxu0 0.0
      %432 = vmatpush1.msra.mxu0 %v410
      %433 = vmatprep.subr.mxu0 0.0
      %434 = vmatpush1.msra.mxu0 %v411
      %435 = vmatprep.subr.mxu0 0.0
      %436 = vmatpush1.msra.mxu0 %v412
      %437 = vmatprep.subr.mxu0 0.0
      %438 = vmatpush1.msra.mxu0 0.0
      %439 = vmatprep.subr.mxu0 0.0
      %440 = vmatpush1.msra.mxu0 0.0
      %441 = vmatprep.subr.mxu0 0.0
      %442 = vmatpush1.msra.mxu0 0.0
      %443 = vmatprep.subr.mxu0 0.0
      %444 = vmatpush1.msra.mxu0 0.0
      %445 = vmatprep.subr.mxu0 0.0
      %446 = vmatpush1.msra.mxu0 0.0
      %447 = vmatprep.subr.mxu0 0.0
      %448 = vmatpush1.msra.mxu0 0.0
      %449 = vmatprep.subr.mxu0 0.0
      %450 = vmatpush1.msra.mxu0 0.0
      %451 = vmatprep.subr.mxu0 0.0
      %452 = vmatpush1.msra.mxu0 0.0
      %453 = vmatprep.subr.mxu0 0.0
      %454 = vmatpush1.msra.mxu0 0.0
      %455 = vmatprep.subr.mxu0 0.0
      %456 = vmatpush1.msra.mxu0 0.0
      %457 = vmatprep.subr.mxu0 0.0
      %458 = vmatpush1.msra.mxu0 0.0
      %459 = vmatprep.subr.mxu0 0.0
      %460 = vmatpush1.msra.mxu0 0.0
      %461 = vmatprep.subr.mxu0 0.0
      %462 = vmatpush1.msra.mxu0 0.0
      %463 = vmatprep.subr.mxu0 0.0
      %464 = vmatpush1.msra.mxu0 0.0
      %465 = vmatprep.subr.mxu0 0.0
      %466 = vmatpush1.msra.mxu0 0.0
      %467 = vmatprep.subr.mxu0 0.0
      %468 = vmatpush1.msra.mxu0 0.0
      %469 = vmatprep.subr.mxu0 0.0
      %470 = vmatpush1.msra.mxu0 0.0
      %471 = vmatprep.subr.mxu0 0.0
      %472 = vmatpush1.msra.mxu0 0.0
      %473 = vmatprep.subr.mxu0 0.0
      %474 = vmatpush1.msra.mxu0 0.0
      %475 = vmatprep.subr.mxu0 0.0
      %476 = vmatpush1.msra.mxu0 0.0
      %477 = vmatprep.subr.mxu0 0.0
      %478 = vmatpush1.msra.mxu0 0.0
      %479 = vmatprep.subr.mxu0 0.0
      %480 = vmatpush1.msra.mxu0 0.0
      %481 = vmatprep.subr.mxu0 0.0
      %482 = vmatpush1.msra.mxu0 0.0
      %483 = vmatprep.mubr.f32.mxu0 0.0
      %484 = vmatmul.mubr.f32.gmra.mrb[0].mxu0 %v417
      %v485 = vpop.f32.mrb[0].mxu0
      %v486 = vadd.f32 0.0, %v485
      %v487 = vpop.f32.mrb[0].mxu0
      %488 = vdwg.mxu0
      %vm489 = vcmp.gt.f32.partialorder %v486, 0.0
      %491 = vset.pattern.permute.xlu0 0
      %492 = vperm.xlu0 %491, %v414
      %v493 = vpop.permute.xlu0 %492
      %v495 = vmul.f32 %v486, %v493
      %v496 = vsel %vm489, %v486, %v495
      %v498 = vlaneseq
      %v499 = vshrl.u32 %v498, 7
      %v500 = vsub.s32 0, %v499
      %v501 = vrot.slane %v253, %v500
      %v503 = vmul.f32 %v496, %v501
      %505 = vrot.lane.b32.xlu0 %v503, 11
      %v506 = vpop.permute.xlu0 %505
      %508 = vst.msk [vmem:[#allocation3] sm:$0xff] %vm351, %v506
      %v509 = vld [vmem:[#allocation3] sm:$0xff]
      %510 = vst.msk [vmem:[#allocation4] sm:$0xff] %vm354, %v509
      %v511 = vld [vmem:[#allocation3] sm:$0xff]
      %513 = vrot.lane.b32.xlu0 %v511, 127
      %v514 = vpop.permute.xlu0 %513
      %516 = vst.msk [vmem:[#allocation4 + $0x8] sm:$0xff] %vm354, %v514
      %v517 = vld [vmem:[#allocation3] sm:$0xff]
      %519 = vrot.lane.b32.xlu0 %v517, 126
      %v520 = vpop.permute.xlu0 %519
      %522 = vst.msk [vmem:[#allocation4 + $0x10] sm:$0xff] %vm354, %v520
      %v523 = vld [vmem:[#allocation3] sm:$0xff]
      %525 = vrot.lane.b32.xlu0 %v523, 118
      %v526 = vpop.permute.xlu0 %525
      %528 = vst.msk [vmem:[#allocation4 + $0x18] sm:$0xff] %vm354, %v526
      %v529 = vld [vmem:[#allocation3] sm:$0xff]
      %531 = vrot.lane.b32.xlu0 %v529, 117
      %v532 = vpop.permute.xlu0 %531
      %534 = vst.msk [vmem:[#allocation4 + $0x20] sm:$0xff] %vm354, %v532
      %v535 = vld [vmem:[#allocation3] sm:$0xff]
      %537 = vrot.lane.b32.xlu0 %v535, 116
      %v538 = vpop.permute.xlu0 %537
      %540 = vst.msk [vmem:[#allocation4 + $0x28] sm:$0xff] %vm354, %v538
      %v541 = vld [vmem:[#allocation3] sm:$0xff]
      %543 = vrot.lane.b32.xlu0 %v541, 108
      %v544 = vpop.permute.xlu0 %543
      %546 = vst.msk [vmem:[#allocation4 + $0x30] sm:$0xff] %vm354, %v544
      %v547 = vld [vmem:[#allocation3] sm:$0xff]
      %549 = vrot.lane.b32.xlu0 %v547, 107
      %v550 = vpop.permute.xlu0 %549
      %552 = vst.msk [vmem:[#allocation4 + $0x38] sm:$0xff] %vm354, %v550
      %v553 = vld [vmem:[#allocation3] sm:$0xff]
      %555 = vrot.lane.b32.xlu0 %v553, 106
      %v556 = vpop.permute.xlu0 %555
      %558 = vst.msk [vmem:[#allocation4 + $0x40] sm:$0xff] %vm354, %v556
      %v559 = vld [vmem:[#allocation4] sm:$0xff]
      %v560 = vld [vmem:[#allocation4 + $0x8] sm:$0xff]
      %v561 = vld [vmem:[#allocation4 + $0x10] sm:$0xff]
      %v562 = vld [vmem:[#allocation4 + $0x18] sm:$0xff]
      %v563 = vld [vmem:[#allocation4 + $0x20] sm:$0xff]
      %v564 = vld [vmem:[#allocation4 + $0x28] sm:$0xff]
      %v565 = vld [vmem:[#allocation4 + $0x30] sm:$0xff]
      %v566 = vld [vmem:[#allocation4 + $0x38] sm:$0xff]
      %v567 = vld [vmem:[#allocation4 + $0x40] sm:$0xff]
      %s568 = scalar_lea.vmem %s3, 8
      %v569 = vld [vmem:[%s568] sm:$0xff]
      %s570 = scalar_lea.vmem %s4, 8
      %v571 = vld [vmem:[%s570] sm:$0xff]
      %v573 = vsel %vm415, %v569, 0
      %575 = vmatprep.subr.mxu0 0.0
      %576 = vmatpush1.msra.mxu0 %v559
      %577 = vmatprep.subr.mxu0 0.0
      %578 = vmatpush1.msra.mxu0 %v560
      %579 = vmatprep.subr.mxu0 0.0
      %580 = vmatpush1.msra.mxu0 %v561
      %581 = vmatprep.subr.mxu0 0.0
      %582 = vmatpush1.msra.mxu0 %v562
      %583 = vmatprep.subr.mxu0 0.0
      %584 = vmatpush1.msra.mxu0 %v563
      %585 = vmatprep.subr.mxu0 0.0
      %586 = vmatpush1.msra.mxu0 %v564
      %587 = vmatprep.subr.mxu0 0.0
      %588 = vmatpush1.msra.mxu0 %v565
      %589 = vmatprep.subr.mxu0 0.0
      %590 = vmatpush1.msra.mxu0 %v566
      %591 = vmatprep.subr.mxu0 0.0
      %592 = vmatpush1.msra.mxu0 %v567
      %593 = vmatprep.subr.mxu0 0.0
      %594 = vmatpush1.msra.mxu0 0.0
      %595 = vmatprep.subr.mxu0 0.0
      %596 = vmatpush1.msra.mxu0 0.0
      %597 = vmatprep.subr.mxu0 0.0
      %598 = vmatpush1.msra.mxu0 0.0
      %599 = vmatprep.subr.mxu0 0.0
      %600 = vmatpush1.msra.mxu0 0.0
      %601 = vmatprep.subr.mxu0 0.0
      %602 = vmatpush1.msra.mxu0 0.0
      %603 = vmatprep.subr.mxu0 0.0
      %604 = vmatpush1.msra.mxu0 0.0
      %605 = vmatprep.subr.mxu0 0.0
      %606 = vmatpush1.msra.mxu0 0.0
      %607 = vmatprep.subr.mxu0 0.0
      %608 = vmatpush1.msra.mxu0 0.0
      %609 = vmatprep.subr.mxu0 0.0
      %610 = vmatpush1.msra.mxu0 0.0
      %611 = vmatprep.subr.mxu0 0.0
      %612 = vmatpush1.msra.mxu0 0.0
      %613 = vmatprep.subr.mxu0 0.0
      %614 = vmatpush1.msra.mxu0 0.0
      %615 = vmatprep.subr.mxu0 0.0
      %616 = vmatpush1.msra.mxu0 0.0
      %617 = vmatprep.subr.mxu0 0.0
      %618 = vmatpush1.msra.mxu0 0.0
      %619 = vmatprep.subr.mxu0 0.0
      %620 = vmatpush1.msra.mxu0 0.0
      %621 = vmatprep.subr.mxu0 0.0
      %622 = vmatpush1.msra.mxu0 0.0
      %623 = vmatprep.subr.mxu0 0.0
      %624 = vmatpush1.msra.mxu0 0.0
      %625 = vmatprep.subr.mxu0 0.0
      %626 = vmatpush1.msra.mxu0 0.0
      %627 = vmatprep.subr.mxu0 0.0
      %628 = vmatpush1.msra.mxu0 0.0
      %629 = vmatprep.subr.mxu0 0.0
      %630 = vmatpush1.msra.mxu0 0.0
      %631 = vmatprep.subr.mxu0 0.0
      %632 = vmatpush1.msra.mxu0 0.0
      %633 = vmatprep.subr.mxu0 0.0
      %634 = vmatpush1.msra.mxu0 0.0
      %635 = vmatprep.subr.mxu0 0.0
      %636 = vmatpush1.msra.mxu0 0.0
      %637 = vmatprep.subr.mxu0 0.0
      %638 = vmatpush1.msra.mxu0 0.0
      %639 = vmatprep.mubr.f32.mxu0 0.0
      %640 = vmatmul.mubr.f32.gmra.mrb[0].mxu0 %v573
      %v641 = vpop.f32.mrb[0].mxu0
      %v642 = vadd.f32 0.0, %v641
      %v643 = vpop.f32.mrb[0].mxu0
      %644 = vdwg.mxu0
      %vm645 = vcmp.gt.f32.partialorder %v642, 0.0
      %647 = vset.pattern.permute.xlu0 0
      %648 = vperm.xlu0 %647, %v571
      %v649 = vpop.permute.xlu0 %648
      %v651 = vmul.f32 %v642, %v649
      %v652 = vsel %vm645, %v642, %v651
      %v653 = vld [vmem:[#allocation2] sm:$0xff]
      %655 = vrot.lane.b32.xlu0 %v653, 117
      %v656 = vpop.permute.xlu0 %655
      %v658 = vadd.f32 %v652, %v656
      %v659 = vmul.f32 %v658, %v501
      %661 = vrot.lane.b32.xlu0 %v659, 11
      %v662 = vpop.permute.xlu0 %661
      %664 = vst.msk [vmem:[#allocation2] sm:$0xff] %vm351, %v662
      %v665 = vld [vmem:[#allocation2] sm:$0xff]
      %666 = vst.msk [vmem:[#allocation4] sm:$0xff] %vm354, %v665
      %v667 = vld [vmem:[#allocation2] sm:$0xff]
      %669 = vrot.lane.b32.xlu0 %v667, 127
      %v670 = vpop.permute.xlu0 %669
      %672 = vst.msk [vmem:[#allocation4 + $0x8] sm:$0xff] %vm354, %v670
      %v673 = vld [vmem:[#allocation2] sm:$0xff]
      %675 = vrot.lane.b32.xlu0 %v673, 126
      %v676 = vpop.permute.xlu0 %675
      %678 = vst.msk [vmem:[#allocation4 + $0x10] sm:$0xff] %vm354, %v676
      %v679 = vld [vmem:[#allocation2] sm:$0xff]
      %681 = vrot.lane.b32.xlu0 %v679, 118
      %v682 = vpop.permute.xlu0 %681
      %684 = vst.msk [vmem:[#allocation4 + $0x18] sm:$0xff] %vm354, %v682
      %v685 = vld [vmem:[#allocation2] sm:$0xff]
      %687 = vrot.lane.b32.xlu0 %v685, 117
      %v688 = vpop.permute.xlu0 %687
      %690 = vst.msk [vmem:[#allocation4 + $0x20] sm:$0xff] %vm354, %v688
      %v691 = vld [vmem:[#allocation2] sm:$0xff]
      %693 = vrot.lane.b32.xlu0 %v691, 116
      %v694 = vpop.permute.xlu0 %693
      %696 = vst.msk [vmem:[#allocation4 + $0x28] sm:$0xff] %vm354, %v694
      %v697 = vld [vmem:[#allocation2] sm:$0xff]
      %699 = vrot.lane.b32.xlu0 %v697, 108
      %v700 = vpop.permute.xlu0 %699
      %702 = vst.msk [vmem:[#allocation4 + $0x30] sm:$0xff] %vm354, %v700
      %v703 = vld [vmem:[#allocation2] sm:$0xff]
      %705 = vrot.lane.b32.xlu0 %v703, 107
      %v706 = vpop.permute.xlu0 %705
      %708 = vst.msk [vmem:[#allocation4 + $0x38] sm:$0xff] %vm354, %v706
      %v709 = vld [vmem:[#allocation2] sm:$0xff]
      %711 = vrot.lane.b32.xlu0 %v709, 106
      %v712 = vpop.permute.xlu0 %711
      %714 = vst.msk [vmem:[#allocation4 + $0x40] sm:$0xff] %vm354, %v712
      %v715 = vld [vmem:[#allocation4] sm:$0xff]
      %v716 = vld [vmem:[#allocation4 + $0x8] sm:$0xff]
      %v717 = vld [vmem:[#allocation4 + $0x10] sm:$0xff]
      %v718 = vld [vmem:[#allocation4 + $0x18] sm:$0xff]
      %v719 = vld [vmem:[#allocation4 + $0x20] sm:$0xff]
      %v720 = vld [vmem:[#allocation4 + $0x28] sm:$0xff]
      %v721 = vld [vmem:[#allocation4 + $0x30] sm:$0xff]
      %v722 = vld [vmem:[#allocation4 + $0x38] sm:$0xff]
      %v723 = vld [vmem:[#allocation4 + $0x40] sm:$0xff]
      %s724 = scalar_lea.vmem %s3, 16
      %v725 = vld [vmem:[%s724] sm:$0xff]
      %s726 = scalar_lea.vmem %s4, 16
      %v727 = vld [vmem:[%s726] sm:$0xff]
      %v729 = vsel %vm415, %v725, 0
      %731 = vmatprep.subr.mxu0 0.0
      %732 = vmatpush1.msra.mxu0 %v715
      %733 = vmatprep.subr.mxu0 0.0
      %734 = vmatpush1.msra.mxu0 %v716
      %735 = vmatprep.subr.mxu0 0.0
      %736 = vmatpush1.msra.mxu0 %v717
      %737 = vmatprep.subr.mxu0 0.0
      %738 = vmatpush1.msra.mxu0 %v718
      %739 = vmatprep.subr.mxu0 0.0
      %740 = vmatpush1.msra.mxu0 %v719
      %741 = vmatprep.subr.mxu0 0.0
      %742 = vmatpush1.msra.mxu0 %v720
      %743 = vmatprep.subr.mxu0 0.0
      %744 = vmatpush1.msra.mxu0 %v721
      %745 = vmatprep.subr.mxu0 0.0
      %746 = vmatpush1.msra.mxu0 %v722
      %747 = vmatprep.subr.mxu0 0.0
      %748 = vmatpush1.msra.mxu0 %v723
      %749 = vmatprep.subr.mxu0 0.0
      %750 = vmatpush1.msra.mxu0 0.0
      %751 = vmatprep.subr.mxu0 0.0
      %752 = vmatpush1.msra.mxu0 0.0
      %753 = vmatprep.subr.mxu0 0.0
      %754 = vmatpush1.msra.mxu0 0.0
      %755 = vmatprep.subr.mxu0 0.0
      %756 = vmatpush1.msra.mxu0 0.0
      %757 = vmatprep.subr.mxu0 0.0
      %758 = vmatpush1.msra.mxu0 0.0
      %759 = vmatprep.subr.mxu0 0.0
      %760 = vmatpush1.msra.mxu0 0.0
      %761 = vmatprep.subr.mxu0 0.0
      %762 = vmatpush1.msra.mxu0 0.0
      %763 = vmatprep.subr.mxu0 0.0
      %764 = vmatpush1.msra.mxu0 0.0
      %765 = vmatprep.subr.mxu0 0.0
      %766 = vmatpush1.msra.mxu0 0.0
      %767 = vmatprep.subr.mxu0 0.0
      %768 = vmatpush1.msra.mxu0 0.0
      %769 = vmatprep.subr.mxu0 0.0
      %770 = vmatpush1.msra.mxu0 0.0
      %771 = vmatprep.subr.mxu0 0.0
      %772 = vmatpush1.msra.mxu0 0.0
      %773 = vmatprep.subr.mxu0 0.0
      %774 = vmatpush1.msra.mxu0 0.0
      %775 = vmatprep.subr.mxu0 0.0
      %776 = vmatpush1.msra.mxu0 0.0
      %777 = vmatprep.subr.mxu0 0.0
      %778 = vmatpush1.msra.mxu0 0.0
      %779 = vmatprep.subr.mxu0 0.0
      %780 = vmatpush1.msra.mxu0 0.0
      %781 = vmatprep.subr.mxu0 0.0
      %782 = vmatpush1.msra.mxu0 0.0
      %783 = vmatprep.subr.mxu0 0.0
      %784 = vmatpush1.msra.mxu0 0.0
      %785 = vmatprep.subr.mxu0 0.0
      %786 = vmatpush1.msra.mxu0 0.0
      %787 = vmatprep.subr.mxu0 0.0
      %788 = vmatpush1.msra.mxu0 0.0
      %789 = vmatprep.subr.mxu0 0.0
      %790 = vmatpush1.msra.mxu0 0.0
      %791 = vmatprep.subr.mxu0 0.0
      %792 = vmatpush1.msra.mxu0 0.0
      %793 = vmatprep.subr.mxu0 0.0
      %794 = vmatpush1.msra.mxu0 0.0
      %795 = vmatprep.mubr.f32.mxu0 0.0
      %796 = vmatmul.mubr.f32.gmra.mrb[0].mxu0 %v729
      %v797 = vpop.f32.mrb[0].mxu0
      %v798 = vadd.f32 0.0, %v797
      %v799 = vpop.f32.mrb[0].mxu0
      %800 = vdwg.mxu0
      %vm801 = vcmp.gt.f32.partialorder %v798, 0.0
      %803 = vset.pattern.permute.xlu0 0
      %804 = vperm.xlu0 %803, %v727
      %v805 = vpop.permute.xlu0 %804
      %v807 = vmul.f32 %v798, %v805
      %v808 = vsel %vm801, %v798, %v807
      %v809 = vmul.f32 %v808, %v501
      %811 = vrot.lane.b32.xlu0 %v809, 11
      %v812 = vpop.permute.xlu0 %811
      %814 = vst.msk [vmem:[#allocation3] sm:$0xff] %vm351, %v812
      %v815 = vld [vmem:[#allocation3] sm:$0xff]
      %816 = vst.msk [vmem:[#allocation4] sm:$0xff] %vm354, %v815
      %v817 = vld [vmem:[#allocation3] sm:$0xff]
      %819 = vrot.lane.b32.xlu0 %v817, 127
      %v820 = vpop.permute.xlu0 %819
      %822 = vst.msk [vmem:[#allocation4 + $0x8] sm:$0xff] %vm354, %v820
      %v823 = vld [vmem:[#allocation3] sm:$0xff]
      %825 = vrot.lane.b32.xlu0 %v823, 126
      %v826 = vpop.permute.xlu0 %825
      %828 = vst.msk [vmem:[#allocation4 + $0x10] sm:$0xff] %vm354, %v826
      %v829 = vld [vmem:[#allocation3] sm:$0xff]
      %831 = vrot.lane.b32.xlu0 %v829, 118
      %v832 = vpop.permute.xlu0 %831
      %834 = vst.msk [vmem:[#allocation4 + $0x18] sm:$0xff] %vm354, %v832
      %v835 = vld [vmem:[#allocation3] sm:$0xff]
      %837 = vrot.lane.b32.xlu0 %v835, 117
      %v838 = vpop.permute.xlu0 %837
      %840 = vst.msk [vmem:[#allocation4 + $0x20] sm:$0xff] %vm354, %v838
      %v841 = vld [vmem:[#allocation3] sm:$0xff]
      %843 = vrot.lane.b32.xlu0 %v841, 116
      %v844 = vpop.permute.xlu0 %843
      %846 = vst.msk [vmem:[#allocation4 + $0x28] sm:$0xff] %vm354, %v844
      %v847 = vld [vmem:[#allocation3] sm:$0xff]
      %849 = vrot.lane.b32.xlu0 %v847, 108
      %v850 = vpop.permute.xlu0 %849
      %852 = vst.msk [vmem:[#allocation4 + $0x30] sm:$0xff] %vm354, %v850
      %v853 = vld [vmem:[#allocation3] sm:$0xff]
      %855 = vrot.lane.b32.xlu0 %v853, 107
      %v856 = vpop.permute.xlu0 %855
      %858 = vst.msk [vmem:[#allocation4 + $0x38] sm:$0xff] %vm354, %v856
      %v859 = vld [vmem:[#allocation3] sm:$0xff]
      %861 = vrot.lane.b32.xlu0 %v859, 106
      %v862 = vpop.permute.xlu0 %861
      %864 = vst.msk [vmem:[#allocation4 + $0x40] sm:$0xff] %vm354, %v862
      %v865 = vld [vmem:[#allocation4] sm:$0xff]
      %v866 = vld [vmem:[#allocation4 + $0x8] sm:$0xff]
      %v867 = vld [vmem:[#allocation4 + $0x10] sm:$0xff]
      %v868 = vld [vmem:[#allocation4 + $0x18] sm:$0xff]
      %v869 = vld [vmem:[#allocation4 + $0x20] sm:$0xff]
      %v870 = vld [vmem:[#allocation4 + $0x28] sm:$0xff]
      %v871 = vld [vmem:[#allocation4 + $0x30] sm:$0xff]
      %v872 = vld [vmem:[#allocation4 + $0x38] sm:$0xff]
      %v873 = vld [vmem:[#allocation4 + $0x40] sm:$0xff]
      %s874 = scalar_lea.vmem %s3, 24
      %v875 = vld [vmem:[%s874] sm:$0xff]
      %s876 = scalar_lea.vmem %s4, 24
      %v877 = vld [vmem:[%s876] sm:$0xff]
      %v879 = vsel %vm415, %v875, 0
      %881 = vmatprep.subr.mxu0 0.0
      %882 = vmatpush1.msra.mxu0 %v865
      %883 = vmatprep.subr.mxu0 0.0
      %884 = vmatpush1.msra.mxu0 %v866
      %885 = vmatprep.subr.mxu0 0.0
      %886 = vmatpush1.msra.mxu0 %v867
      %887 = vmatprep.subr.mxu0 0.0
      %888 = vmatpush1.msra.mxu0 %v868
      %889 = vmatprep.subr.mxu0 0.0
      %890 = vmatpush1.msra.mxu0 %v869
      %891 = vmatprep.subr.mxu0 0.0
      %892 = vmatpush1.msra.mxu0 %v870
      %893 = vmatprep.subr.mxu0 0.0
      %894 = vmatpush1.msra.mxu0 %v871
      %895 = vmatprep.subr.mxu0 0.0
      %896 = vmatpush1.msra.mxu0 %v872
      %897 = vmatprep.subr.mxu0 0.0
      %898 = vmatpush1.msra.mxu0 %v873
      %899 = vmatprep.subr.mxu0 0.0
      %900 = vmatpush1.msra.mxu0 0.0
      %901 = vmatprep.subr.mxu0 0.0
      %902 = vmatpush1.msra.mxu0 0.0
      %903 = vmatprep.subr.mxu0 0.0
      %904 = vmatpush1.msra.mxu0 0.0
      %905 = vmatprep.subr.mxu0 0.0
      %906 = vmatpush1.msra.mxu0 0.0
      %907 = vmatprep.subr.mxu0 0.0
      %908 = vmatpush1.msra.mxu0 0.0
      %909 = vmatprep.subr.mxu0 0.0
      %910 = vmatpush1.msra.mxu0 0.0
      %911 = vmatprep.subr.mxu0 0.0
      %912 = vmatpush1.msra.mxu0 0.0
      %913 = vmatprep.subr.mxu0 0.0
      %914 = vmatpush1.msra.mxu0 0.0
      %915 = vmatprep.subr.mxu0 0.0
      %916 = vmatpush1.msra.mxu0 0.0
      %917 = vmatprep.subr.mxu0 0.0
      %918 = vmatpush1.msra.mxu0 0.0
      %919 = vmatprep.subr.mxu0 0.0
      %920 = vmatpush1.msra.mxu0 0.0
      %921 = vmatprep.subr.mxu0 0.0
      %922 = vmatpush1.msra.mxu0 0.0
      %923 = vmatprep.subr.mxu0 0.0
      %924 = vmatpush1.msra.mxu0 0.0
      %925 = vmatprep.subr.mxu0 0.0
      %926 = vmatpush1.msra.mxu0 0.0
      %927 = vmatprep.subr.mxu0 0.0
      %928 = vmatpush1.msra.mxu0 0.0
      %929 = vmatprep.subr.mxu0 0.0
      %930 = vmatpush1.msra.mxu0 0.0
      %931 = vmatprep.subr.mxu0 0.0
      %932 = vmatpush1.msra.mxu0 0.0
      %933 = vmatprep.subr.mxu0 0.0
      %934 = vmatpush1.msra.mxu0 0.0
      %935 = vmatprep.subr.mxu0 0.0
      %936 = vmatpush1.msra.mxu0 0.0
      %937 = vmatprep.subr.mxu0 0.0
      %938 = vmatpush1.msra.mxu0 0.0
      %939 = vmatprep.subr.mxu0 0.0
      %940 = vmatpush1.msra.mxu0 0.0
      %941 = vmatprep.subr.mxu0 0.0
      %942 = vmatpush1.msra.mxu0 0.0
      %943 = vmatprep.subr.mxu0 0.0
      %944 = vmatpush1.msra.mxu0 0.0
      %945 = vmatprep.mubr.f32.mxu0 0.0
      %946 = vmatmul.mubr.f32.gmra.mrb[0].mxu0 %v879
      %v947 = vpop.f32.mrb[0].mxu0
      %v948 = vadd.f32 0.0, %v947
      %v949 = vpop.f32.mrb[0].mxu0
      %950 = vdwg.mxu0
      %vm951 = vcmp.gt.f32.partialorder %v948, 0.0
      %953 = vset.pattern.permute.xlu0 0
      %954 = vperm.xlu0 %953, %v877
      %v955 = vpop.permute.xlu0 %954
      %v957 = vmul.f32 %v948, %v955
      %v958 = vsel %vm951, %v948, %v957
      %v959 = vld [vmem:[#allocation2] sm:$0xff]
      %961 = vrot.lane.b32.xlu0 %v959, 117
      %v962 = vpop.permute.xlu0 %961
      %v964 = vadd.f32 %v958, %v962
      %965 = vst.msk [vmem:[%s249] sm:$0xff] %vm354, %v964
      %p966 = scmp.lt.s32.totalorder %s17, 1
      %s967 = scalar_select %p966, %s17, 1
      %s968 = smul.addr %s967, 8
      %s969 = scalar_lea.vmem %s6, %s968
      // Predicated region
      $region45: #{basic_block_forward.1} parent=43 // pred_check
        %p970 = pneg %p166
      $region46: #{basic_block_forward.1} parent=43 // pred_check_branch
        %972 = sbr.rel (%p970) target = $region48
      $region47: #{basic_block_forward.1} parent=43 // pred_region
        _
      $region48: #{basic_block_forward.1} parent=43 // pred_fallthru
        _
    $region44: #{basic_block_forward.1} parent=5 // pred_fallthru
      _
    %p973 = scmp.le.s32.totalorder 2, %s12
    // Predicated region
    $region49: #{basic_block_forward.1} parent=5 // pred_check
      %p974 = pneg %p973
    $region50: #{basic_block_forward.1} parent=5 // pred_check_branch
      %976 = sbr.rel (%p974) target = $region52
    $region51: #{basic_block_forward.1} parent=5 // pred_region
      %s977 = ssub.s32 %s12, 2
      // Predicated region
      $region53: #{basic_block_forward.1} parent=51 // pred_check
        %p978 = pneg %p172
      $region54: #{basic_block_forward.1} parent=51 // pred_check_branch
        %980 = sbr.rel (%p978) target = $region56
      $region55: #{basic_block_forward.1} parent=51 // pred_region
        %p981 = scmp.lt.s32.totalorder %s18, 1
        %s982 = scalar_select %p981, %s18, 1
        %s983 = smul.addr %s982, 8
        %s984 = scalar_lea.vmem %s6, %s983
      $region56: #{basic_block_forward.1} parent=51 // pred_fallthru
        _
    $region52: #{basic_block_forward.1} parent=5 // pred_fallthru
      _
  $region6: #{basic_block_forward.1} parent=0 // loop_footer
    %s16 = sadd.s32 1, %s12
  $region7: #{basic_block_forward.1} parent=0 // loop_footer_branch
    %11 = sbr.rel target = $region3
  $region8: #{basic_block_forward.1} parent=0 // loop_exit
    _

</llo_original>
